<compile_context>
chip_gen: v7x
topology: tpu7x:2x2x1
jax: 0.10.0
libtpu: 0.0.40
codegen_flags: <defaults>
</compile_context>

<pallas_src>
import functools

import jax
import jax.numpy as jnp
import numpy as np
from jax.experimental import pallas as pl
from jax.experimental.pallas import tpu as pltpu

H = 64          # GRU hidden size (as in the PyTorch module)
HP = 128        # lane-padded per-gate width (one full vreg lane width)
G3 = 3 * HP     # padded width of one direction's [r|z|n] gate block

# Lane offsets inside the single merged (1, PARAMS_W) parameter vector.
OFF_BGI_F = 0                 # folded fwd input bias  (b_ih_f + [b_hh_r, b_hh_z, 0])
OFF_BGI_B = G3                # folded bwd input bias
OFF_BHN_F = 2 * G3            # fwd b_hh_n  (stays inside r*(...))
OFF_BHN_B = 2 * G3 + HP       # bwd b_hh_n
OFF_WOUT_F = 2 * G3 + 2 * HP  # Linear weight, forward half (lane padded)
OFF_WOUT_B = 2 * G3 + 3 * HP  # Linear weight, backward half
OFF_BOUT = 2 * G3 + 4 * HP    # Linear bias (lane 0, rest zero)
PARAMS_W = 2 * G3 + 5 * HP    # = 1408 = 11 * 128  (lane-aligned)


def gru_net_kernel(x_ref,        # (T*B, D)   time-major, flattened, f32
                   w_ih_f_ref,   # (D, G3)    fwd input->gate weights, bf16, padded
                   w_ih_b_ref,   # (D, G3)    bwd input->gate weights, bf16, padded
                   w_hh_ref,     # (HP, G3)   fwd hidden->gate weights, bf16, padded
                   params_ref,   # (1, PARAMS_W) merged biases + Linear params, f32
                   out_ref,      # (B, 1)
                   gi_scr,       # VMEM scratch (T*B, G3) f32
                   *, seq_len, batch):
    T, B = seq_len, batch

    # ---- prologue: hoisted FORWARD input projection for every timestep in one
    # matmul; b_ih + r/z parts of b_hh already folded into the bias. Result is
    # parked in VMEM scratch so the unrolled loop reads aligned (B, G3) tiles
    # instead of keeping the whole (T*B, G3) value live across the unroll.
    x_bf = x_ref[...].astype(jnp.bfloat16)
    b_gi_f = params_ref[:, OFF_BGI_F:OFF_BGI_F + G3]
    gi_scr[...] = jnp.dot(x_bf, w_ih_f_ref[...],
                          preferred_element_type=jnp.float32) + b_gi_f

    b_hn_f = params_ref[:, OFF_BHN_F:OFF_BHN_F + HP]
    w_hh = w_hh_ref[...]

    # ---- peeled step t = 0: h0 == 0 -> gh == 0, so no matmul on the first step.
    # Padding lanes: gi pad = 0, b_hn pad = 0 -> n pad = tanh(0) = 0 -> h pad = 0.
    gi0 = gi_scr[0:B, :]
    rz0 = jax.nn.sigmoid(gi0[:, :2 * HP])                      # fused [r|z]
    n0 = jnp.tanh(gi0[:, 2 * HP:] + rz0[:, :HP] * b_hn_f)
    h = (1.0 - rz0[:, HP:]) * n0                                # (B, HP), pad lanes 0

    # ---- steps 1 .. T-1, statically unrolled. Only h @ w_hh remains on the
    # serial chain; every gate slice is 128-lane / 8-sublane aligned.
    for t in range(1, T):
        gi = gi_scr[t * B:(t + 1) * B, :]                       # static, aligned
        gh = jnp.dot(h.astype(jnp.bfloat16), w_hh,
                     preferred_element_type=jnp.float32)        # (B, G3)
        rz = jax.nn.sigmoid(gi[:, :2 * HP] + gh[:, :2 * HP])    # fused [r|z]
        n = jnp.tanh(gi[:, 2 * HP:] + rz[:, :HP] * (gh[:, 2 * HP:] + b_hn_f))
        z = rz[:, HP:]
        h = (1.0 - z) * n + z * h
    h_fwd = h

    # ---- backward direction: only r_out[:, -1, H:] is consumed, which is the
    # reverse GRU's FIRST step on x[:, T-1] from h0 = 0, so its h @ w_hh_b term
    # is exactly zero -> no hidden matmul; input gates come from one tiny dot on
    # the last timestep's rows only.
    x_last = x_ref[(T - 1) * B:T * B, :].astype(jnp.bfloat16)
    b_gi_b = params_ref[:, OFF_BGI_B:OFF_BGI_B + G3]
    gi_b = jnp.dot(x_last, w_ih_b_ref[...],
                   preferred_element_type=jnp.float32) + b_gi_b
    b_hn_b = params_ref[:, OFF_BHN_B:OFF_BHN_B + HP]
    rz_b = jax.nn.sigmoid(gi_b[:, :2 * HP])
    n_b = jnp.tanh(gi_b[:, 2 * HP:] + rz_b[:, :HP] * b_hn_b)
    h_bwd = (1.0 - rz_b[:, HP:]) * n_b

    # ---- Linear(128, 1) as fused multiply + lane reduction: no 64-offset concat,
    # no N=1 MXU matmul. Padding lanes of h_* and w_out are zero -> add nothing.
    w_out_f = params_ref[:, OFF_WOUT_F:OFF_WOUT_F + HP]
    w_out_b = params_ref[:, OFF_WOUT_B:OFF_WOUT_B + HP]
    b_out = params_ref[:, OFF_BOUT:OFF_BOUT + 1]
    out_ref[...] = jnp.sum(h_fwd * w_out_f + h_bwd * w_out_b,
                           axis=-1, keepdims=True) + b_out


def gru_net_forward(x, packed):
    """x: (B, T, D) float32, batch-first (same contract as the PyTorch module)."""
    B, T, D = x.shape
    # Layout plumbing only: time-major + flatten so the hoisted input projection
    # is a single well-filled (T*B, D) @ (D, G3) matmul.
    x_tm = jnp.transpose(x, (1, 0, 2)).reshape(T * B, D)

    args = (x_tm, packed["w_ih_f"], packed["w_ih_b"],
            packed["w_hh_f"], packed["params"])

    vmem = pl.BlockSpec(memory_space=pltpu.MemorySpace.VMEM)
    kernel = functools.partial(gru_net_kernel, seq_len=T, batch=B)

    # Everything (a few KB) lives comfortably in VMEM on v5e/v6e/v7x; no grid
    # needed at these sizes.
    return pl.pallas_call(
        kernel,
        out_shape=jax.ShapeDtypeStruct((B, 1), jnp.float32),
        in_specs=[vmem] * len(args),
        out_specs=pl.BlockSpec(memory_space=pltpu.MemorySpace.VMEM),
        scratch_shapes=[pltpu.VMEM((T * B, G3), jnp.float32)],
    )(*args)


def init_raw_params(key, input_size, hidden_size=H):
    """PyTorch-layout params, PyTorch-style uniform(-1/sqrt(fan), 1/sqrt(fan)) init."""
    Hh = hidden_size
    keys = jax.random.split(key, 10)
    k_rnn = 1.0 / (Hh ** 0.5)
    k_out = 1.0 / ((2 * Hh) ** 0.5)

    def u(kk, shape, scale):
        return jax.random.uniform(kk, shape, jnp.float32, minval=-scale, maxval=scale)

    return {
        # gate order [r, z, n], PyTorch shapes
        "w_ih_f": u(keys[0], (3 * Hh, input_size), k_rnn),
        "w_hh_f": u(keys[1], (3 * Hh, Hh), k_rnn),
        "b_ih_f": u(keys[2], (3 * Hh,), k_rnn),
        "b_hh_f": u(keys[3], (3 * Hh,), k_rnn),
        "w_ih_b": u(keys[4], (3 * Hh, input_size), k_rnn),
        "w_hh_b": u(keys[5], (3 * Hh, Hh), k_rnn),   # unused by the kernel: h0 == 0
        "b_ih_b": u(keys[6], (3 * Hh,), k_rnn),
        "b_hh_b": u(keys[7], (3 * Hh,), k_rnn),
        "w_out": u(keys[8], (1, 2 * Hh), k_out),
        "b_out": u(keys[9], (1,), k_out),
    }


def pack_params(raw):
    """One-time repack of PyTorch-layout params into the kernel's layout.

    * weights transposed to (in_dim, out_dim) so the kernel does x @ W,
    * each gate padded 64 -> 128 lanes (zeros) so every gate slice is vreg-aligned,
    * b_ih and the r/z parts of b_hh folded into one per-direction bias; b_hh_n kept
      separate (applied inside r*(...)),
    * all small (1, .) params merged into ONE lane-aligned vector (1 DMA),
    * matmul weights stored as bf16 (MXU truncates at default precision anyway),
    * the padding-lane-zero invariant is asserted (a layout change cannot silently
      corrupt lanes 64..127 and leak into the recurrence / final reduction).
    """
    def pad_gates_cols(w):            # (in, 3H) -> (in, 3HP)
        r, z, n = jnp.split(w, 3, axis=1)
        pad = lambda g: jnp.pad(g, ((0, 0), (0, HP - H)))
        return jnp.concatenate([pad(r), pad(z), pad(n)], axis=1)

    def pad_gates_bias(b):            # (3H,) -> (1, 3HP)
        return pad_gates_cols(b.reshape(1, 3 * H))

    w_ih_f = pad_gates_cols(raw["w_ih_f"].T)                                  # (D, G3)
    w_ih_b = pad_gates_cols(raw["w_ih_b"].T)
    w_hh_f = jnp.pad(pad_gates_cols(raw["w_hh_f"].T), ((0, HP - H), (0, 0)))  # (HP, G3)

    b_ih_f = pad_gates_bias(raw["b_ih_f"])
    b_ih_b = pad_gates_bias(raw["b_ih_b"])
    b_hh_f = pad_gates_bias(raw["b_hh_f"])
    b_hh_b = pad_gates_bias(raw["b_hh_b"])

    zero_n = jnp.zeros((1, HP), jnp.float32)
    fold = lambda bi, bh: bi + jnp.concatenate([bh[:, :2 * HP], zero_n], axis=1)
    pad_h = lambda v: jnp.pad(v, ((0, 0), (0, HP - H)))                        # (1,H)->(1,HP)

    params = jnp.concatenate([
        fold(b_ih_f, b_hh_f),                       # OFF_BGI_F
        fold(b_ih_b, b_hh_b),                       # OFF_BGI_B
        b_hh_f[:, 2 * HP:],                         # OFF_BHN_F
        b_hh_b[:, 2 * HP:],                         # OFF_BHN_B
        pad_h(raw["w_out"][:, :H]),                 # OFF_WOUT_F
        pad_h(raw["w_out"][:, H:]),                 # OFF_WOUT_B
        jnp.pad(raw["b_out"].reshape(1, 1), ((0, 0), (0, HP - 1))),  # OFF_BOUT
    ], axis=1)                                       # (1, PARAMS_W)

    # ---- padding-lane-zero invariant checks (host-side, eager, f32 arrays) ----
    gate_pad = np.concatenate([np.arange(g * HP + H, (g + 1) * HP) for g in range(3)])
    hp_pad = np.arange(H, HP)
    assert not np.any(np.asarray(w_ih_f)[:, gate_pad]), "w_ih_f pad lanes nonzero"
    assert not np.any(np.asarray(w_ih_b)[:, gate_pad]), "w_ih_b pad lanes nonzero"
    assert not np.any(np.asarray(w_hh_f)[:, gate_pad]), "w_hh_f pad cols nonzero"
    assert not np.any(np.asarray(w_hh_f)[H:HP, :]), "w_hh_f pad rows nonzero"
    p_np = np.asarray(params)
    assert p_np.shape == (1, PARAMS_W)
    for off in (OFF_BGI_F, OFF_BGI_B):
        assert not np.any(p_np[:, off + gate_pad]), "b_gi pad lanes nonzero"
    for off in (OFF_BHN_F, OFF_BHN_B, OFF_WOUT_F, OFF_WOUT_B):
        assert not np.any(p_np[:, off + hp_pad]), "param pad lanes nonzero"
    assert not np.any(p_np[:, OFF_BOUT + 1:OFF_BOUT + HP]), "b_out pad lanes nonzero"

    return {
        "w_ih_f": w_ih_f.astype(jnp.bfloat16),       # (D, G3)
        "w_ih_b": w_ih_b.astype(jnp.bfloat16),       # (D, G3)
        "w_hh_f": w_hh_f.astype(jnp.bfloat16),       # (HP, G3)
        "params": params,                            # (1, PARAMS_W) f32
    }


def gru_net_reference(x, raw):
    """Pure-JAX replica of the PyTorch GRUNet forward pass (validation only)."""
    B, T, _ = x.shape

    def cell(x_t, h, w_ih, w_hh, b_ih, b_hh):
        gi = x_t @ w_ih.T + b_ih
        gh = h @ w_hh.T + b_hh
        i_r, i_z, i_n = jnp.split(gi, 3, axis=1)
        h_r, h_z, h_n = jnp.split(gh, 3, axis=1)
        r = jax.nn.sigmoid(i_r + h_r)
        z = jax.nn.sigmoid(i_z + h_z)
        n = jnp.tanh(i_n + r * h_n)
        return (1.0 - z) * n + z * h

    h_f = jnp.zeros((B, H), jnp.float32)
    for t in range(T):
        h_f = cell(x[:, t], h_f, raw["w_ih_f"], raw["w_hh_f"],
                   raw["b_ih_f"], raw["b_hh_f"])

    # Full reverse pass; its output aligned with time index T-1 is its first step.
    h_b = jnp.zeros((B, H), jnp.float32)
    out_b_last = None
    for t in range(T - 1, -1, -1):
        h_b = cell(x[:, t], h_b, raw["w_ih_b"], raw["w_hh_b"],
                   raw["b_ih_b"], raw["b_hh_b"])
        if t == T - 1:
            out_b_last = h_b

    r_last = jnp.concatenate([h_f, out_b_last], axis=1)                       # (B, 128)
    return r_last @ raw["w_out"].T + raw["b_out"]


if __name__ == "__main__":
    key = jax.random.PRNGKey(0)
    kx, kp = jax.random.split(key)

    B, T, D = 8, 8, 16   # batch=8 fills the 8 sublanes; seq=8; input_size=16
    x = jax.random.normal(kx, (B, T, D), jnp.float32)

    raw = init_raw_params(kp, D)
    packed = pack_params(raw)

    out = jax.block_until_ready(gru_net_forward(x, packed))
    assert out.shape == (B, 1) and out.dtype == jnp.float32, (out.shape, out.dtype)

    ref = jax.block_until_ready(gru_net_reference(x, raw))
    max_err = float(np.max(np.abs(np.asarray(out) - np.asarray(ref))))
    # bf16 MXU operands (same truncation default precision applies) -> 2e-2 tol.
    assert np.allclose(np.asarray(out), np.asarray(ref), atol=2e-2, rtol=2e-2), max_err

    print("KERNEL_OK")
</pallas_src>

<mosaic_0001>
module attributes {stable_mosaic.version = 11 : i64} {
  func.func @gru_net_kernel(%arg0: memref<64x16xf32, #tpu.memory_space<vmem>>, %arg1: memref<16x384xbf16, #tpu.memory_space<vmem>>, %arg2: memref<16x384xbf16, #tpu.memory_space<vmem>>, %arg3: memref<128x384xbf16, #tpu.memory_space<vmem>>, %arg4: memref<1x1408xf32, #tpu.memory_space<vmem>>, %arg5: memref<8x1xf32, #tpu.memory_space<vmem>>, %arg6: memref<64x384xf32, #tpu.memory_space<vmem>>) attributes {dimension_semantics = [], scalar_prefetch = 0 : i64, scratch_operands = 1 : i64, tpu.core_type = #tpu.core_type<tc>} {
    %c0 = arith.constant 0 : index
    %c0_0 = arith.constant 0 : index
    %0 = vector.load %arg0[%c0, %c0_0] : memref<64x16xf32, #tpu.memory_space<vmem>>, vector<64x16xf32>
    %1 = arith.truncf %0 : vector<64x16xf32> to vector<64x16xbf16>
    %c0_1 = arith.constant 0 : index
    %c0_2 = arith.constant 0 : index
    %2 = vector.load %arg4[%c0_1, %c0_2] : memref<1x1408xf32, #tpu.memory_space<vmem>>, vector<1x384xf32>
    %c0_3 = arith.constant 0 : index
    %c0_4 = arith.constant 0 : index
    %3 = vector.load %arg1[%c0_3, %c0_4] : memref<16x384xbf16, #tpu.memory_space<vmem>>, vector<16x384xbf16>
    %cst = arith.constant dense<0.000000e+00> : vector<64x384xf32>
    %4 = tpu.matmul %1, %3, %cst {dimension_numbers = #tpu.dot_dimension_numbers<[1], [0], [0], [1], [0, 0, 1, 1], [], []>} : vector<64x16xbf16>, vector<16x384xbf16>, vector<64x384xf32> -> vector<64x384xf32>
    %5 = vector.broadcast %2 : vector<1x384xf32> to vector<64x384xf32>
    %6 = arith.addf %4, %5 : vector<64x384xf32>
    %c0_5 = arith.constant 0 : index
    %c0_6 = arith.constant 0 : index
    %7 = vector.load %arg6[%c0_5, %c0_6] : memref<64x384xf32, #tpu.memory_space<vmem>>, vector<64x384xf32>
    tpu.vector_store %arg6[%c0_5, %c0_6], %6 {strides = array<i32>} : memref<64x384xf32, #tpu.memory_space<vmem>>, vector<64x384xf32>,
    %c0_7 = arith.constant 0 : index
    %c768 = arith.constant 768 : index
    %8 = vector.load %arg4[%c0_7, %c768] : memref<1x1408xf32, #tpu.memory_space<vmem>>, vector<1x128xf32>
    %c0_8 = arith.constant 0 : index
    %c0_9 = arith.constant 0 : index
    %9 = vector.load %arg3[%c0_8, %c0_9] : memref<128x384xbf16, #tpu.memory_space<vmem>>, vector<128x384xbf16>
    %c0_10 = arith.constant 0 : index
    %c0_11 = arith.constant 0 : index
    %10 = vector.load %arg6[%c0_10, %c0_11] : memref<64x384xf32, #tpu.memory_space<vmem>>, vector<8x384xf32>
    %11 = vector.extract_strided_slice %10 {offsets = [0, 0], sizes = [8, 256], strides = [1, 1]} : vector<8x384xf32> to vector<8x256xf32>
    %12 = arith.negf %11 : vector<8x256xf32>
    %13 = math.exp %12 : vector<8x256xf32>
    %cst_12 = arith.constant 1.000000e+00 : f32
    %14 = vector.broadcast %cst_12 : f32 to vector<8x256xf32>
    %15 = arith.addf %14, %13 : vector<8x256xf32>
    %16 = arith.divf %14, %15 : vector<8x256xf32>
    %17 = vector.extract_strided_slice %10 {offsets = [0, 256], sizes = [8, 128], strides = [1, 1]} : vector<8x384xf32> to vector<8x128xf32>
    %18 = vector.extract_strided_slice %16 {offsets = [0, 0], sizes = [8, 128], strides = [1, 1]} : vector<8x256xf32> to vector<8x128xf32>
    %19 = vector.broadcast %8 : vector<1x128xf32> to vector<8x128xf32>
    %20 = arith.mulf %18, %19 : vector<8x128xf32>
    %21 = arith.addf %17, %20 : vector<8x128xf32>
    %22 = math.tanh %21 : vector<8x128xf32>
    %23 = vector.extract_strided_slice %16 {offsets = [0, 128], sizes = [8, 128], strides = [1, 1]} : vector<8x256xf32> to vector<8x128xf32>
    %cst_13 = arith.constant 1.000000e+00 : f32
    %24 = vector.broadcast %cst_13 : f32 to vector<8x128xf32>
    %25 = arith.subf %24, %23 : vector<8x128xf32>
    %26 = arith.mulf %25, %22 : vector<8x128xf32>
    %c8 = arith.constant 8 : index
    %c0_14 = arith.constant 0 : index
    %27 = vector.load %arg6[%c8, %c0_14] : memref<64x384xf32, #tpu.memory_space<vmem>>, vector<8x384xf32>
    %28 = arith.truncf %26 : vector<8x128xf32> to vector<8x128xbf16>
    %cst_15 = arith.constant dense<0.000000e+00> : vector<8x384xf32>
    %29 = tpu.matmul %28, %9, %cst_15 {dimension_numbers = #tpu.dot_dimension_numbers<[1], [0], [0], [1], [0, 0, 1, 1], [], []>} : vector<8x128xbf16>, vector<128x384xbf16>, vector<8x384xf32> -> vector<8x384xf32>
    %30 = vector.extract_strided_slice %27 {offsets = [0, 0], sizes = [8, 256], strides = [1, 1]} : vector<8x384xf32> to vector<8x256xf32>
    %31 = vector.extract_strided_slice %29 {offsets = [0, 0], sizes = [8, 256], strides = [1, 1]} : vector<8x384xf32> to vector<8x256xf32>
    %32 = arith.addf %30, %31 : vector<8x256xf32>
    %33 = arith.negf %32 : vector<8x256xf32>
    %34 = math.exp %33 : vector<8x256xf32>
    %cst_16 = arith.constant 1.000000e+00 : f32
    %35 = vector.broadcast %cst_16 : f32 to vector<8x256xf32>
    %36 = arith.addf %35, %34 : vector<8x256xf32>
    %37 = arith.divf %35, %36 : vector<8x256xf32>
    %38 = vector.extract_strided_slice %27 {offsets = [0, 256], sizes = [8, 128], strides = [1, 1]} : vector<8x384xf32> to vector<8x128xf32>
    %39 = vector.extract_strided_slice %37 {offsets = [0, 0], sizes = [8, 128], strides = [1, 1]} : vector<8x256xf32> to vector<8x128xf32>
    %40 = vector.extract_strided_slice %29 {offsets = [0, 256], sizes = [8, 128], strides = [1, 1]} : vector<8x384xf32> to vector<8x128xf32>
    %41 = vector.broadcast %8 : vector<1x128xf32> to vector<8x128xf32>
    %42 = arith.addf %40, %41 : vector<8x128xf32>
    %43 = arith.mulf %39, %42 : vector<8x128xf32>
    %44 = arith.addf %38, %43 : vector<8x128xf32>
    %45 = math.tanh %44 : vector<8x128xf32>
    %46 = vector.extract_strided_slice %37 {offsets = [0, 128], sizes = [8, 128], strides = [1, 1]} : vector<8x256xf32> to vector<8x128xf32>
    %cst_17 = arith.constant 1.000000e+00 : f32
    %47 = vector.broadcast %cst_17 : f32 to vector<8x128xf32>
    %48 = arith.subf %47, %46 : vector<8x128xf32>
    %49 = arith.mulf %48, %45 : vector<8x128xf32>
    %50 = arith.mulf %46, %26 : vector<8x128xf32>
    %51 = arith.addf %49, %50 : vector<8x128xf32>
    %c16 = arith.constant 16 : index
    %c0_18 = arith.constant 0 : index
    %52 = vector.load %arg6[%c16, %c0_18] : memref<64x384xf32, #tpu.memory_space<vmem>>, vector<8x384xf32>
    %53 = arith.truncf %51 : vector<8x128xf32> to vector<8x128xbf16>
    %cst_19 = arith.constant dense<0.000000e+00> : vector<8x384xf32>
    %54 = tpu.matmul %53, %9, %cst_19 {dimension_numbers = #tpu.dot_dimension_numbers<[1], [0], [0], [1], [0, 0, 1, 1], [], []>} : vector<8x128xbf16>, vector<128x384xbf16>, vector<8x384xf32> -> vector<8x384xf32>
    %55 = vector.extract_strided_slice %52 {offsets = [0, 0], sizes = [8, 256], strides = [1, 1]} : vector<8x384xf32> to vector<8x256xf32>
    %56 = vector.extract_strided_slice %54 {offsets = [0, 0], sizes = [8, 256], strides = [1, 1]} : vector<8x384xf32> to vector<8x256xf32>
    %57 = arith.addf %55, %56 : vector<8x256xf32>
    %58 = arith.negf %57 : vector<8x256xf32>
    %59 = math.exp %58 : vector<8x256xf32>
    %cst_20 = arith.constant 1.000000e+00 : f32
    %60 = vector.broadcast %cst_20 : f32 to vector<8x256xf32>
    %61 = arith.addf %60, %59 : vector<8x256xf32>
    %62 = arith.divf %60, %61 : vector<8x256xf32>
    %63 = vector.extract_strided_slice %52 {offsets = [0, 256], sizes = [8, 128], strides = [1, 1]} : vector<8x384xf32> to vector<8x128xf32>
    %64 = vector.extract_strided_slice %62 {offsets = [0, 0], sizes = [8, 128], strides = [1, 1]} : vector<8x256xf32> to vector<8x128xf32>
    %65 = vector.extract_strided_slice %54 {offsets = [0, 256], sizes = [8, 128], strides = [1, 1]} : vector<8x384xf32> to vector<8x128xf32>
    %66 = vector.broadcast %8 : vector<1x128xf32> to vector<8x128xf32>
    %67 = arith.addf %65, %66 : vector<8x128xf32>
    %68 = arith.mulf %64, %67 : vector<8x128xf32>
    %69 = arith.addf %63, %68 : vector<8x128xf32>
    %70 = math.tanh %69 : vector<8x128xf32>
    %71 = vector.extract_strided_slice %62 {offsets = [0, 128], sizes = [8, 128], strides = [1, 1]} : vector<8x256xf32> to vector<8x128xf32>
    %cst_21 = arith.constant 1.000000e+00 : f32
    %72 = vector.broadcast %cst_21 : f32 to vector<8x128xf32>
    %73 = arith.subf %72, %71 : vector<8x128xf32>
    %74 = arith.mulf %73, %70 : vector<8x128xf32>
    %75 = arith.mulf %71, %51 : vector<8x128xf32>
    %76 = arith.addf %74, %75 : vector<8x128xf32>
    %c24 = arith.constant 24 : index
    %c0_22 = arith.constant 0 : index
    %77 = vector.load %arg6[%c24, %c0_22] : memref<64x384xf32, #tpu.memory_space<vmem>>, vector<8x384xf32>
    %78 = arith.truncf %76 : vector<8x128xf32> to vector<8x128xbf16>
    %cst_23 = arith.constant dense<0.000000e+00> : vector<8x384xf32>
    %79 = tpu.matmul %78, %9, %cst_23 {dimension_numbers = #tpu.dot_dimension_numbers<[1], [0], [0], [1], [0, 0, 1, 1], [], []>} : vector<8x128xbf16>, vector<128x384xbf16>, vector<8x384xf32> -> vector<8x384xf32>
    %80 = vector.extract_strided_slice %77 {offsets = [0, 0], sizes = [8, 256], strides = [1, 1]} : vector<8x384xf32> to vector<8x256xf32>
    %81 = vector.extract_strided_slice %79 {offsets = [0, 0], sizes = [8, 256], strides = [1, 1]} : vector<8x384xf32> to vector<8x256xf32>
    %82 = arith.addf %80, %81 : vector<8x256xf32>
    %83 = arith.negf %82 : vector<8x256xf32>
    %84 = math.exp %83 : vector<8x256xf32>
    %cst_24 = arith.constant 1.000000e+00 : f32
    %85 = vector.broadcast %cst_24 : f32 to vector<8x256xf32>
    %86 = arith.addf %85, %84 : vector<8x256xf32>
    %87 = arith.divf %85, %86 : vector<8x256xf32>
    %88 = vector.extract_strided_slice %77 {offsets = [0, 256], sizes = [8, 128], strides = [1, 1]} : vector<8x384xf32> to vector<8x128xf32>
    %89 = vector.extract_strided_slice %87 {offsets = [0, 0], sizes = [8, 128], strides = [1, 1]} : vector<8x256xf32> to vector<8x128xf32>
    %90 = vector.extract_strided_slice %79 {offsets = [0, 256], sizes = [8, 128], strides = [1, 1]} : vector<8x384xf32> to vector<8x128xf32>
    %91 = vector.broadcast %8 : vector<1x128xf32> to vector<8x128xf32>
    %92 = arith.addf %90, %91 : vector<8x128xf32>
    %93 = arith.mulf %89, %92 : vector<8x128xf32>
    %94 = arith.addf %88, %93 : vector<8x128xf32>
    %95 = math.tanh %94 : vector<8x128xf32>
    %96 = vector.extract_strided_slice %87 {offsets = [0, 128], sizes = [8, 128], strides = [1, 1]} : vector<8x256xf32> to vector<8x128xf32>
    %cst_25 = arith.constant 1.000000e+00 : f32
    %97 = vector.broadcast %cst_25 : f32 to vector<8x128xf32>
    %98 = arith.subf %97, %96 : vector<8x128xf32>
    %99 = arith.mulf %98, %95 : vector<8x128xf32>
    %100 = arith.mulf %96, %76 : vector<8x128xf32>
    %101 = arith.addf %99, %100 : vector<8x128xf32>
    %c32 = arith.constant 32 : index
    %c0_26 = arith.constant 0 : index
    %102 = vector.load %arg6[%c32, %c0_26] : memref<64x384xf32, #tpu.memory_space<vmem>>, vector<8x384xf32>
    %103 = arith.truncf %101 : vector<8x128xf32> to vector<8x128xbf16>
    %cst_27 = arith.constant dense<0.000000e+00> : vector<8x384xf32>
    %104 = tpu.matmul %103, %9, %cst_27 {dimension_numbers = #tpu.dot_dimension_numbers<[1], [0], [0], [1], [0, 0, 1, 1], [], []>} : vector<8x128xbf16>, vector<128x384xbf16>, vector<8x384xf32> -> vector<8x384xf32>
    %105 = vector.extract_strided_slice %102 {offsets = [0, 0], sizes = [8, 256], strides = [1, 1]} : vector<8x384xf32> to vector<8x256xf32>
    %106 = vector.extract_strided_slice %104 {offsets = [0, 0], sizes = [8, 256], strides = [1, 1]} : vector<8x384xf32> to vector<8x256xf32>
    %107 = arith.addf %105, %106 : vector<8x256xf32>
    %108 = arith.negf %107 : vector<8x256xf32>
    %109 = math.exp %108 : vector<8x256xf32>
    %cst_28 = arith.constant 1.000000e+00 : f32
    %110 = vector.broadcast %cst_28 : f32 to vector<8x256xf32>
    %111 = arith.addf %110, %109 : vector<8x256xf32>
    %112 = arith.divf %110, %111 : vector<8x256xf32>
    %113 = vector.extract_strided_slice %102 {offsets = [0, 256], sizes = [8, 128], strides = [1, 1]} : vector<8x384xf32> to vector<8x128xf32>
    %114 = vector.extract_strided_slice %112 {offsets = [0, 0], sizes = [8, 128], strides = [1, 1]} : vector<8x256xf32> to vector<8x128xf32>
    %115 = vector.extract_strided_slice %104 {offsets = [0, 256], sizes = [8, 128], strides = [1, 1]} : vector<8x384xf32> to vector<8x128xf32>
    %116 = vector.broadcast %8 : vector<1x128xf32> to vector<8x128xf32>
    %117 = arith.addf %115, %116 : vector<8x128xf32>
    %118 = arith.mulf %114, %117 : vector<8x128xf32>
    %119 = arith.addf %113, %118 : vector<8x128xf32>
    %120 = math.tanh %119 : vector<8x128xf32>
    %121 = vector.extract_strided_slice %112 {offsets = [0, 128], sizes = [8, 128], strides = [1, 1]} : vector<8x256xf32> to vector<8x128xf32>
    %cst_29 = arith.constant 1.000000e+00 : f32
    %122 = vector.broadcast %cst_29 : f32 to vector<8x128xf32>
    %123 = arith.subf %122, %121 : vector<8x128xf32>
    %124 = arith.mulf %123, %120 : vector<8x128xf32>
    %125 = arith.mulf %121, %101 : vector<8x128xf32>
    %126 = arith.addf %124, %125 : vector<8x128xf32>
    %c40 = arith.constant 40 : index
    %c0_30 = arith.constant 0 : index
    %127 = vector.load %arg6[%c40, %c0_30] : memref<64x384xf32, #tpu.memory_space<vmem>>, vector<8x384xf32>
    %128 = arith.truncf %126 : vector<8x128xf32> to vector<8x128xbf16>
    %cst_31 = arith.constant dense<0.000000e+00> : vector<8x384xf32>
    %129 = tpu.matmul %128, %9, %cst_31 {dimension_numbers = #tpu.dot_dimension_numbers<[1], [0], [0], [1], [0, 0, 1, 1], [], []>} : vector<8x128xbf16>, vector<128x384xbf16>, vector<8x384xf32> -> vector<8x384xf32>
    %130 = vector.extract_strided_slice %127 {offsets = [0, 0], sizes = [8, 256], strides = [1, 1]} : vector<8x384xf32> to vector<8x256xf32>
    %131 = vector.extract_strided_slice %129 {offsets = [0, 0], sizes = [8, 256], strides = [1, 1]} : vector<8x384xf32> to vector<8x256xf32>
    %132 = arith.addf %130, %131 : vector<8x256xf32>
    %133 = arith.negf %132 : vector<8x256xf32>
    %134 = math.exp %133 : vector<8x256xf32>
    %cst_32 = arith.constant 1.000000e+00 : f32
    %135 = vector.broadcast %cst_32 : f32 to vector<8x256xf32>
    %136 = arith.addf %135, %134 : vector<8x256xf32>
    %137 = arith.divf %135, %136 : vector<8x256xf32>
    %138 = vector.extract_strided_slice %127 {offsets = [0, 256], sizes = [8, 128], strides = [1, 1]} : vector<8x384xf32> to vector<8x128xf32>
    %139 = vector.extract_strided_slice %137 {offsets = [0, 0], sizes = [8, 128], strides = [1, 1]} : vector<8x256xf32> to vector<8x128xf32>
    %140 = vector.extract_strided_slice %129 {offsets = [0, 256], sizes = [8, 128], strides = [1, 1]} : vector<8x384xf32> to vector<8x128xf32>
    %141 = vector.broadcast %8 : vector<1x128xf32> to vector<8x128xf32>
    %142 = arith.addf %140, %141 : vector<8x128xf32>
    %143 = arith.mulf %139, %142 : vector<8x128xf32>
    %144 = arith.addf %138, %143 : vector<8x128xf32>
    %145 = math.tanh %144 : vector<8x128xf32>
    %146 = vector.extract_strided_slice %137 {offsets = [0, 128], sizes = [8, 128], strides = [1, 1]} : vector<8x256xf32> to vector<8x128xf32>
    %cst_33 = arith.constant 1.000000e+00 : f32
    %147 = vector.broadcast %cst_33 : f32 to vector<8x128xf32>
    %148 = arith.subf %147, %146 : vector<8x128xf32>
    %149 = arith.mulf %148, %145 : vector<8x128xf32>
    %150 = arith.mulf %146, %126 : vector<8x128xf32>
    %151 = arith.addf %149, %150 : vector<8x128xf32>
    %c48 = arith.constant 48 : index
    %c0_34 = arith.constant 0 : index
    %152 = vector.load %arg6[%c48, %c0_34] : memref<64x384xf32, #tpu.memory_space<vmem>>, vector<8x384xf32>
    %153 = arith.truncf %151 : vector<8x128xf32> to vector<8x128xbf16>
    %cst_35 = arith.constant dense<0.000000e+00> : vector<8x384xf32>
    %154 = tpu.matmul %153, %9, %cst_35 {dimension_numbers = #tpu.dot_dimension_numbers<[1], [0], [0], [1], [0, 0, 1, 1], [], []>} : vector<8x128xbf16>, vector<128x384xbf16>, vector<8x384xf32> -> vector<8x384xf32>
    %155 = vector.extract_strided_slice %152 {offsets = [0, 0], sizes = [8, 256], strides = [1, 1]} : vector<8x384xf32> to vector<8x256xf32>
    %156 = vector.extract_strided_slice %154 {offsets = [0, 0], sizes = [8, 256], strides = [1, 1]} : vector<8x384xf32> to vector<8x256xf32>
    %157 = arith.addf %155, %156 : vector<8x256xf32>
    %158 = arith.negf %157 : vector<8x256xf32>
    %159 = math.exp %158 : vector<8x256xf32>
    %cst_36 = arith.constant 1.000000e+00 : f32
    %160 = vector.broadcast %cst_36 : f32 to vector<8x256xf32>
    %161 = arith.addf %160, %159 : vector<8x256xf32>
    %162 = arith.divf %160, %161 : vector<8x256xf32>
    %163 = vector.extract_strided_slice %152 {offsets = [0, 256], sizes = [8, 128], strides = [1, 1]} : vector<8x384xf32> to vector<8x128xf32>
    %164 = vector.extract_strided_slice %162 {offsets = [0, 0], sizes = [8, 128], strides = [1, 1]} : vector<8x256xf32> to vector<8x128xf32>
    %165 = vector.extract_strided_slice %154 {offsets = [0, 256], sizes = [8, 128], strides = [1, 1]} : vector<8x384xf32> to vector<8x128xf32>
    %166 = vector.broadcast %8 : vector<1x128xf32> to vector<8x128xf32>
    %167 = arith.addf %165, %166 : vector<8x128xf32>
    %168 = arith.mulf %164, %167 : vector<8x128xf32>
    %169 = arith.addf %163, %168 : vector<8x128xf32>
    %170 = math.tanh %169 : vector<8x128xf32>
    %171 = vector.extract_strided_slice %162 {offsets = [0, 128], sizes = [8, 128], strides = [1, 1]} : vector<8x256xf32> to vector<8x128xf32>
    %cst_37 = arith.constant 1.000000e+00 : f32
    %172 = vector.broadcast %cst_37 : f32 to vector<8x128xf32>
    %173 = arith.subf %172, %171 : vector<8x128xf32>
    %174 = arith.mulf %173, %170 : vector<8x128xf32>
    %175 = arith.mulf %171, %151 : vector<8x128xf32>
    %176 = arith.addf %174, %175 : vector<8x128xf32>
    %c56 = arith.constant 56 : index
    %c0_38 = arith.constant 0 : index
    %177 = vector.load %arg6[%c56, %c0_38] : memref<64x384xf32, #tpu.memory_space<vmem>>, vector<8x384xf32>
    %178 = arith.truncf %176 : vector<8x128xf32> to vector<8x128xbf16>
    %cst_39 = arith.constant dense<0.000000e+00> : vector<8x384xf32>
    %179 = tpu.matmul %178, %9, %cst_39 {dimension_numbers = #tpu.dot_dimension_numbers<[1], [0], [0], [1], [0, 0, 1, 1], [], []>} : vector<8x128xbf16>, vector<128x384xbf16>, vector<8x384xf32> -> vector<8x384xf32>
    %180 = vector.extract_strided_slice %177 {offsets = [0, 0], sizes = [8, 256], strides = [1, 1]} : vector<8x384xf32> to vector<8x256xf32>
    %181 = vector.extract_strided_slice %179 {offsets = [0, 0], sizes = [8, 256], strides = [1, 1]} : vector<8x384xf32> to vector<8x256xf32>
    %182 = arith.addf %180, %181 : vector<8x256xf32>
    %183 = arith.negf %182 : vector<8x256xf32>
    %184 = math.exp %183 : vector<8x256xf32>
    %cst_40 = arith.constant 1.000000e+00 : f32
    %185 = vector.broadcast %cst_40 : f32 to vector<8x256xf32>
    %186 = arith.addf %185, %184 : vector<8x256xf32>
    %187 = arith.divf %185, %186 : vector<8x256xf32>
    %188 = vector.extract_strided_slice %177 {offsets = [0, 256], sizes = [8, 128], strides = [1, 1]} : vector<8x384xf32> to vector<8x128xf32>
    %189 = vector.extract_strided_slice %187 {offsets = [0, 0], sizes = [8, 128], strides = [1, 1]} : vector<8x256xf32> to vector<8x128xf32>
    %190 = vector.extract_strided_slice %179 {offsets = [0, 256], sizes = [8, 128], strides = [1, 1]} : vector<8x384xf32> to vector<8x128xf32>
    %191 = vector.broadcast %8 : vector<1x128xf32> to vector<8x128xf32>
    %192 = arith.addf %190, %191 : vector<8x128xf32>
    %193 = arith.mulf %189, %192 : vector<8x128xf32>
    %194 = arith.addf %188, %193 : vector<8x128xf32>
    %195 = math.tanh %194 : vector<8x128xf32>
    %196 = vector.extract_strided_slice %187 {offsets = [0, 128], sizes = [8, 128], strides = [1, 1]} : vector<8x256xf32> to vector<8x128xf32>
    %cst_41 = arith.constant 1.000000e+00 : f32
    %197 = vector.broadcast %cst_41 : f32 to vector<8x128xf32>
    %198 = arith.subf %197, %196 : vector<8x128xf32>
    %199 = arith.mulf %198, %195 : vector<8x128xf32>
    %200 = arith.mulf %196, %176 : vector<8x128xf32>
    %201 = arith.addf %199, %200 : vector<8x128xf32>
    %c56_42 = arith.constant 56 : index
    %c0_43 = arith.constant 0 : index
    %202 = vector.load %arg0[%c56_42, %c0_43] : memref<64x16xf32, #tpu.memory_space<vmem>>, vector<8x16xf32>
    %203 = arith.truncf %202 : vector<8x16xf32> to vector<8x16xbf16>
    %c0_44 = arith.constant 0 : index
    %c384 = arith.constant 384 : index
    %204 = vector.load %arg4[%c0_44, %c384] : memref<1x1408xf32, #tpu.memory_space<vmem>>, vector<1x384xf32>
    %c0_45 = arith.constant 0 : index
    %c0_46 = arith.constant 0 : index
    %205 = vector.load %arg2[%c0_45, %c0_46] : memref<16x384xbf16, #tpu.memory_space<vmem>>, vector<16x384xbf16>
    %cst_47 = arith.constant dense<0.000000e+00> : vector<8x384xf32>
    %206 = tpu.matmul %203, %205, %cst_47 {dimension_numbers = #tpu.dot_dimension_numbers<[1], [0], [0], [1], [0, 0, 1, 1], [], []>} : vector<8x16xbf16>, vector<16x384xbf16>, vector<8x384xf32> -> vector<8x384xf32>
    %207 = vector.broadcast %204 : vector<1x384xf32> to vector<8x384xf32>
    %208 = arith.addf %206, %207 : vector<8x384xf32>
    %c0_48 = arith.constant 0 : index
    %c896 = arith.constant 896 : index
    %209 = vector.load %arg4[%c0_48, %c896] : memref<1x1408xf32, #tpu.memory_space<vmem>>, vector<1x128xf32>
    %210 = vector.extract_strided_slice %208 {offsets = [0, 0], sizes = [8, 256], strides = [1, 1]} : vector<8x384xf32> to vector<8x256xf32>
    %211 = arith.negf %210 : vector<8x256xf32>
    %212 = math.exp %211 : vector<8x256xf32>
    %cst_49 = arith.constant 1.000000e+00 : f32
    %213 = vector.broadcast %cst_49 : f32 to vector<8x256xf32>
    %214 = arith.addf %213, %212 : vector<8x256xf32>
    %215 = arith.divf %213, %214 : vector<8x256xf32>
    %216 = vector.extract_strided_slice %208 {offsets = [0, 256], sizes = [8, 128], strides = [1, 1]} : vector<8x384xf32> to vector<8x128xf32>
    %217 = vector.extract_strided_slice %215 {offsets = [0, 0], sizes = [8, 128], strides = [1, 1]} : vector<8x256xf32> to vector<8x128xf32>
    %218 = vector.broadcast %209 : vector<1x128xf32> to vector<8x128xf32>
    %219 = arith.mulf %217, %218 : vector<8x128xf32>
    %220 = arith.addf %216, %219 : vector<8x128xf32>
    %221 = math.tanh %220 : vector<8x128xf32>
    %222 = vector.extract_strided_slice %215 {offsets = [0, 128], sizes = [8, 128], strides = [1, 1]} : vector<8x256xf32> to vector<8x128xf32>
    %cst_50 = arith.constant 1.000000e+00 : f32
    %223 = vector.broadcast %cst_50 : f32 to vector<8x128xf32>
    %224 = arith.subf %223, %222 : vector<8x128xf32>
    %225 = arith.mulf %224, %221 : vector<8x128xf32>
    %c0_51 = arith.constant 0 : index
    %c1024 = arith.constant 1024 : index
    %226 = vector.load %arg4[%c0_51, %c1024] : memref<1x1408xf32, #tpu.memory_space<vmem>>, vector<1x128xf32>
    %c0_52 = arith.constant 0 : index
    %c1152 = arith.constant 1152 : index
    %227 = vector.load %arg4[%c0_52, %c1152] : memref<1x1408xf32, #tpu.memory_space<vmem>>, vector<1x128xf32>
    %c0_53 = arith.constant 0 : index
    %c1280 = arith.constant 1280 : index
    %228 = vector.load %arg4[%c0_53, %c1280] : memref<1x1408xf32, #tpu.memory_space<vmem>>, vector<1x1xf32>
    %229 = vector.broadcast %226 : vector<1x128xf32> to vector<8x128xf32>
    %230 = arith.mulf %201, %229 : vector<8x128xf32>
    %231 = vector.broadcast %227 : vector<1x128xf32> to vector<8x128xf32>
    %232 = arith.mulf %225, %231 : vector<8x128xf32>
    %233 = arith.addf %230, %232 : vector<8x128xf32>
    %cst_54 = arith.constant dense<0.000000e+00> : vector<8xf32>
    %234 = vector.multi_reduction <add>, %233, %cst_54 [1] : vector<8x128xf32> to vector<8xf32>
    %235 = vector.shape_cast %234 : vector<8xf32> to vector<8x1xf32>
    %236 = vector.broadcast %228 : vector<1x1xf32> to vector<8x1xf32>
    %237 = arith.addf %235, %236 : vector<8x1xf32>
    %c0_55 = arith.constant 0 : index
    %c0_56 = arith.constant 0 : index
    %238 = vector.load %arg5[%c0_55, %c0_56] : memref<8x1xf32, #tpu.memory_space<vmem>>, vector<8x1xf32>
    tpu.vector_store %arg5[%c0_55, %c0_56], %237 {strides = array<i32>} : memref<8x1xf32, #tpu.memory_space<vmem>>, vector<8x1xf32>,
    return
  }
}

</mosaic_0001>

<llo_original>
// kernel: tpu_custom_call.1
$region0: #{tpu_custom_call.1}
  #allocation0 [shape = 'u32[]', space=smem, size = 0x4, offset = 0x4, fixed_abs, tag = 'smem constant byte address 0x4 - core index']
  #allocation1 [shape = 'u32[144,128]{1,0:T(1,128)}', space=vmem, size = 0x12000, scoped, tag = 'internal scratch']
  #allocation2 [shape = 'f32[64,384]{1,0:T(8,128)}', space=vmem, size = 0x18000, scoped, tag = 'scratch operand']
  %s0 = inlined_call_operand.vmem [shape: f32[64,16], index: 0, kind: input, shape index: {}]
  %s1 = inlined_call_operand.vmem [shape: bf16[16,384], index: 1, kind: input, shape index: {}]
  %s2 = inlined_call_operand.vmem [shape: bf16[16,384], index: 2, kind: input, shape index: {}]
  %s3 = inlined_call_operand.hbm [shape: bf16[128,384], index: 3, kind: input, shape index: {}]
  %s4 = inlined_call_operand.vmem [shape: f32[1,1408], index: 4, kind: input, shape index: {}]
  %s5 = inlined_call_operand.vmem [shape: f32[8,1], index: 5, kind: output, shape index: {}]
  %s6 = sld [smem:[#allocation0]]
  $region34: #{tpu_custom_call.1} parent=0
    _
  %s8 = ssub.s32 1, %s6
  %s9 = scalar_select 0, %s8, %s6
  $region1: #{tpu_custom_call.1} parent=0
    #allocation3 [shape = 'u8[98304]{0}', space=vmem, size = 0x18000, scoped, tag = 'input window, operand 3, single buffered']
    #allocation4 [shape = 's32[1]{0}', space=sflag, size = 0x4, scoped, tag = 'scoped memory for tpu_custom_call.1']
    %10 = vsyncpa [#allocation4], 0
    // Predicated region
    $region2: #{tpu_custom_call.1} parent=1 // pred_check
      _
    $region3: #{tpu_custom_call.1} parent=1 // pred_check_branch
      %12 = sbr.rel (0) target = $region5
    $region4: #{tpu_custom_call.1} parent=1 // pred_region
      _
    $region5: #{tpu_custom_call.1} parent=1 // pred_fallthru
      _
    // Predicated region
    $region6: #{tpu_custom_call.1} parent=1 // pred_check
      _
    $region7: #{tpu_custom_call.1} parent=1 // pred_check_branch
      %14 = sbr.rel (0) target = $region9
    $region8: #{tpu_custom_call.1} parent=1 // pred_region
      _
    $region9: #{tpu_custom_call.1} parent=1 // pred_fallthru
      _
    // Predicated region
    $region10: #{tpu_custom_call.1} parent=1 // pred_check
      _
    $region11: #{tpu_custom_call.1} parent=1 // pred_check_branch
      %16 = sbr.rel (0) target = $region13
    $region12: #{tpu_custom_call.1} parent=1 // pred_region
      _
    $region13: #{tpu_custom_call.1} parent=1 // pred_fallthru
      _
    // Predicated region
    $region14: #{tpu_custom_call.1} parent=1 // pred_check
      _
    $region15: #{tpu_custom_call.1} parent=1 // pred_check_branch
      %18 = sbr.rel (0) target = $region17
    $region16: #{tpu_custom_call.1} parent=1 // pred_region
      %s20 = ssub.s32 3072, 3072
      %21 = vsyncadd [#allocation4], %s20
      %s22 = sshll.u32 [#allocation3], 4
      %s23 = int_to_ptr.vmem [resolvable:$true] %s22
      %28 = dma.hbm_to_vmem [thread:$0]  %s3, 3072, %s23, [#allocation4], 192, 192, 12
    $region17: #{tpu_custom_call.1} parent=1 // pred_fallthru
      _
    // Predicated region
    $region18: #{tpu_custom_call.1} parent=1 // pred_check
      _
    $region19: #{tpu_custom_call.1} parent=1 // pred_check_branch
      %30 = sbr.rel (0) target = $region21
    $region20: #{tpu_custom_call.1} parent=1 // pred_region
      _
    $region21: #{tpu_custom_call.1} parent=1 // pred_fallthru
      _
    // Predicated region
    $region22: #{tpu_custom_call.1} parent=1 // pred_check
      _
    $region23: #{tpu_custom_call.1} parent=1 // pred_check_branch
      %32 = sbr.rel (0) target = $region25
    $region24: #{tpu_custom_call.1} parent=1 // pred_region
      %33 = dma.done [#allocation4], 3072
    $region25: #{tpu_custom_call.1} parent=1 // pred_fallthru
      _
    %v35 = vld [vmem:[%s0] sm:$0xff]
    %v36 = vld [vmem:[%s0 + $0x8] sm:$0xff]
    %v37 = vld [vmem:[%s0 + $0x10] sm:$0xff]
    %v38 = vld [vmem:[%s0 + $0x18] sm:$0xff]
    %v39 = vld [vmem:[%s0 + $0x20] sm:$0xff]
    %v40 = vld [vmem:[%s0 + $0x28] sm:$0xff]
    %v41 = vld [vmem:[%s0 + $0x30] sm:$0xff]
    %v42 = vld [vmem:[%s0 + $0x38] sm:$0xff]
    %v43 = vpack.c.bf16 %v36, %v35
    %v44 = vpack.c.bf16 %v38, %v37
    %v45 = vpack.c.bf16 %v40, %v39
    %v46 = vpack.c.bf16 %v42, %v41
    %v47 = vld [vmem:[%s4] sm:$0x7]
    %v48 = vld [vmem:[%s1] sm:$0xff]
    %v49 = vld [vmem:[%s1 + $0x8] sm:$0xf]
    %v50 = vld [vmem:[%s1 + $0xc] sm:$0xff]
    %v51 = vld [vmem:[%s1 + $0x14] sm:$0xf]
    %v53 = vlaneseq
    %v54 = vshrl.u32 %v53, 7
    %v55 = vsub.s32 0, %v54
    %v56 = vrot.slane %v47, %v55
    %v57 = vlaneseq
    %v58 = vshrl.u32 %v57, 7
    %v59 = vsub.s32 1, %v58
    %v60 = vrot.slane %v47, %v59
    %v61 = vlaneseq
    %v62 = vshrl.u32 %v61, 7
    %v63 = vsub.s32 2, %v62
    %v64 = vrot.slane %v47, %v63
    %v72 = vunpack.c.l.b16 %v48
    %v73 = vunpack.c.h.b16 %v48
    %v74 = vunpack.c.l.b16 %v49
    %v75 = vunpack.c.l.b16 %v50
    %v76 = vunpack.c.h.b16 %v50
    %v77 = vunpack.c.l.b16 %v51
    %v78 = vpack.c.b16 %v75, %v72
    %v79 = vpack.c.b16 %v76, %v73
    %v80 = vpack.c.b16 %v77, %v74
    %vm84 = vcmask 130048
    %v86 = vsel %vm84, %v43, 0
    %v89 = vsel %vm84, %v44, 0
    %v92 = vsel %vm84, %v45, 0
    %v95 = vsel %vm84, %v46, 0
    %97 = vmatprep.subr.bf16.mxu0 %v79
    %98 = vmatpush1.bf16.msra.mxu0 %v78
    %99 = vmatprep.subr.bf16.mxu0 0
    %100 = vmatpush1.bf16.msra.mxu0 0
    %101 = vmatprep.subr.bf16.mxu0 0
    %102 = vmatpush1.bf16.msra.mxu0 0
    %103 = vmatprep.subr.bf16.mxu0 0
    %104 = vmatpush1.bf16.msra.mxu0 0
    %105 = vmatprep.subr.bf16.mxu0 0
    %106 = vmatpush1.bf16.msra.mxu0 0
    %107 = vmatprep.subr.bf16.mxu0 0
    %108 = vmatpush1.bf16.msra.mxu0 0
    %109 = vmatprep.subr.bf16.mxu0 0
    %110 = vmatpush1.bf16.msra.mxu0 0
    %111 = vmatprep.subr.bf16.mxu0 0
    %112 = vmatpush1.bf16.msra.mxu0 0
    %113 = vmatprep.subr.bf16.mxu0 0
    %114 = vmatpush1.bf16.msra.mxu0 0
    %115 = vmatprep.subr.bf16.mxu0 0
    %116 = vmatpush1.bf16.msra.mxu0 0
    %117 = vmatprep.subr.bf16.mxu0 0
    %118 = vmatpush1.bf16.msra.mxu0 0
    %119 = vmatprep.subr.bf16.mxu0 0
    %120 = vmatpush1.bf16.msra.mxu0 0
    %121 = vmatprep.subr.bf16.mxu0 0
    %122 = vmatpush1.bf16.msra.mxu0 0
    %123 = vmatprep.subr.bf16.mxu0 0
    %124 = vmatpush1.bf16.msra.mxu0 0
    %125 = vmatprep.subr.bf16.mxu0 0
    %126 = vmatpush1.bf16.msra.mxu0 0
    %127 = vmatprep.subr.bf16.mxu0 0
    %128 = vmatpush1.bf16.msra.mxu0 0
    %129 = vmatprep.mubr.bf16.mxu0 0
    %130 = vmatmul.mubr.bf16.gmra.mrb[0].mxu0 %v86
    %v131 = vpop.f32.mrb[0].mxu0
    %v132 = vadd.f32 %v56, %v131
    %v133 = vpop.f32.mrb[0].mxu0
    %v134 = vadd.f32 %v60, %v133
    %v135 = vpop.f32.mrb[0].mxu0
    %v136 = vadd.f32 %v56, %v135
    %v137 = vpop.f32.mrb[0].mxu0
    %v138 = vadd.f32 %v60, %v137
    %139 = vmatprep.mubr.bf16.mxu0 0
    %140 = vmatmul.mubr.bf16.gmra.mrb[0].mxu0 %v89
    %v141 = vpop.f32.mrb[0].mxu0
    %v142 = vadd.f32 %v56, %v141
    %v143 = vpop.f32.mrb[0].mxu0
    %v144 = vadd.f32 %v60, %v143
    %v145 = vpop.f32.mrb[0].mxu0
    %v146 = vadd.f32 %v56, %v145
    %v147 = vpop.f32.mrb[0].mxu0
    %v148 = vadd.f32 %v60, %v147
    %149 = vmatprep.mubr.bf16.mxu0 0
    %150 = vmatmul.mubr.bf16.gmra.mrb[0].mxu0 %v92
    %v151 = vpop.f32.mrb[0].mxu0
    %v152 = vadd.f32 %v56, %v151
    %v153 = vpop.f32.mrb[0].mxu0
    %v154 = vadd.f32 %v60, %v153
    %v155 = vpop.f32.mrb[0].mxu0
    %v156 = vadd.f32 %v56, %v155
    %v157 = vpop.f32.mrb[0].mxu0
    %v158 = vadd.f32 %v60, %v157
    %159 = vmatprep.mubr.bf16.mxu0 0
    %160 = vmatmul.mubr.bf16.gmra.mrb[0].mxu0 %v95
    %v161 = vpop.f32.mrb[0].mxu0
    %v162 = vadd.f32 %v56, %v161
    %v163 = vpop.f32.mrb[0].mxu0
    %v164 = vadd.f32 %v60, %v163
    %v165 = vpop.f32.mrb[0].mxu0
    %v166 = vadd.f32 %v56, %v165
    %v167 = vpop.f32.mrb[0].mxu0
    %v168 = vadd.f32 %v60, %v167
    %169 = vdwg.mxu0
    %170 = vmatprep.subr.bf16.mxu0 0
    %171 = vmatpush1.bf16.msra.mxu0 %v80
    %172 = vmatprep.subr.bf16.mxu0 0
    %173 = vmatpush1.bf16.msra.mxu0 0
    %174 = vmatprep.subr.bf16.mxu0 0
    %175 = vmatpush1.bf16.msra.mxu0 0
    %176 = vmatprep.subr.bf16.mxu0 0
    %177 = vmatpush1.bf16.msra.mxu0 0
    %178 = vmatprep.subr.bf16.mxu0 0
    %179 = vmatpush1.bf16.msra.mxu0 0
    %180 = vmatprep.subr.bf16.mxu0 0
    %181 = vmatpush1.bf16.msra.mxu0 0
    %182 = vmatprep.subr.bf16.mxu0 0
    %183 = vmatpush1.bf16.msra.mxu0 0
    %184 = vmatprep.subr.bf16.mxu0 0
    %185 = vmatpush1.bf16.msra.mxu0 0
    %186 = vmatprep.subr.bf16.mxu0 0
    %187 = vmatpush1.bf16.msra.mxu0 0
    %188 = vmatprep.subr.bf16.mxu0 0
    %189 = vmatpush1.bf16.msra.mxu0 0
    %190 = vmatprep.subr.bf16.mxu0 0
    %191 = vmatpush1.bf16.msra.mxu0 0
    %192 = vmatprep.subr.bf16.mxu0 0
    %193 = vmatpush1.bf16.msra.mxu0 0
    %194 = vmatprep.subr.bf16.mxu0 0
    %195 = vmatpush1.bf16.msra.mxu0 0
    %196 = vmatprep.subr.bf16.mxu0 0
    %197 = vmatpush1.bf16.msra.mxu0 0
    %198 = vmatprep.subr.bf16.mxu0 0
    %199 = vmatpush1.bf16.msra.mxu0 0
    %200 = vmatprep.subr.bf16.mxu0 0
    %201 = vmatpush1.bf16.msra.mxu0 0
    %202 = vmatprep.mubr.bf16.mxu0 0
    %203 = vmatmul.mubr.bf16.gmra.mrb[0].mxu0 %v86
    %v204 = vpop.f32.mrb[0].mxu0
    %v205 = vadd.f32 %v64, %v204
    %v206 = vpop.f32.mrb[0].mxu0
    %v207 = vpop.f32.mrb[0].mxu0
    %v208 = vadd.f32 %v64, %v207
    %v209 = vpop.f32.mrb[0].mxu0
    %210 = vmatprep.mubr.bf16.mxu0 0
    %211 = vmatmul.mubr.bf16.gmra.mrb[0].mxu0 %v89
    %v212 = vpop.f32.mrb[0].mxu0
    %v213 = vadd.f32 %v64, %v212
    %v214 = vpop.f32.mrb[0].mxu0
    %v215 = vpop.f32.mrb[0].mxu0
    %v216 = vadd.f32 %v64, %v215
    %v217 = vpop.f32.mrb[0].mxu0
    %218 = vmatprep.mubr.bf16.mxu0 0
    %219 = vmatmul.mubr.bf16.gmra.mrb[0].mxu0 %v92
    %v220 = vpop.f32.mrb[0].mxu0
    %v221 = vadd.f32 %v64, %v220
    %v222 = vpop.f32.mrb[0].mxu0
    %v223 = vpop.f32.mrb[0].mxu0
    %v224 = vadd.f32 %v64, %v223
    %v225 = vpop.f32.mrb[0].mxu0
    %226 = vmatprep.mubr.bf16.mxu0 0
    %227 = vmatmul.mubr.bf16.gmra.mrb[0].mxu0 %v95
    %v228 = vpop.f32.mrb[0].mxu0
    %v229 = vadd.f32 %v64, %v228
    %v230 = vpop.f32.mrb[0].mxu0
    %v231 = vpop.f32.mrb[0].mxu0
    %v232 = vadd.f32 %v64, %v231
    %v233 = vpop.f32.mrb[0].mxu0
    %234 = vdwg.mxu0
    %235 = vst [vmem:[#allocation2] sm:$0xff] %v132
    %236 = vst [vmem:[#allocation2 + $0x8] sm:$0xff] %v134
    %237 = vst [vmem:[#allocation2 + $0x10] sm:$0xff] %v205
    %238 = vst [vmem:[#allocation2 + $0x18] sm:$0xff] %v136
    %239 = vst [vmem:[#allocation2 + $0x20] sm:$0xff] %v138
    %240 = vst [vmem:[#allocation2 + $0x28] sm:$0xff] %v208
    %241 = vst [vmem:[#allocation2 + $0x30] sm:$0xff] %v142
    %242 = vst [vmem:[#allocation2 + $0x38] sm:$0xff] %v144
    %243 = vst [vmem:[#allocation2 + $0x40] sm:$0xff] %v213
    %244 = vst [vmem:[#allocation2 + $0x48] sm:$0xff] %v146
    %245 = vst [vmem:[#allocation2 + $0x50] sm:$0xff] %v148
    %246 = vst [vmem:[#allocation2 + $0x58] sm:$0xff] %v216
    %247 = vst [vmem:[#allocation2 + $0x60] sm:$0xff] %v152
    %248 = vst [vmem:[#allocation2 + $0x68] sm:$0xff] %v154
    %249 = vst [vmem:[#allocation2 + $0x70] sm:$0xff] %v221
    %250 = vst [vmem:[#allocation2 + $0x78] sm:$0xff] %v156
    %251 = vst [vmem:[#allocation2 + $0x80] sm:$0xff] %v158
    %252 = vst [vmem:[#allocation2 + $0x88] sm:$0xff] %v224
    %253 = vst [vmem:[#allocation2 + $0x90] sm:$0xff] %v162
    %254 = vst [vmem:[#allocation2 + $0x98] sm:$0xff] %v164
    %255 = vst [vmem:[#allocation2 + $0xa0] sm:$0xff] %v229
    %256 = vst [vmem:[#allocation2 + $0xa8] sm:$0xff] %v166
    %257 = vst [vmem:[#allocation2 + $0xb0] sm:$0xff] %v168
    %258 = vst [vmem:[#allocation2 + $0xb8] sm:$0xff] %v232
    %v259 = vld [vmem:[%s4 + $0x6] sm:$0x1]
    %v260 = vld [vmem:[#allocation3] sm:$0xff]
    %v261 = vld [vmem:[#allocation3 + $0x8] sm:$0xf]
    %v262 = vld [vmem:[#allocation3 + $0xc] sm:$0xff]
    %v263 = vld [vmem:[#allocation3 + $0x14] sm:$0xf]
    %v264 = vld [vmem:[#allocation3 + $0x18] sm:$0xff]
    %v265 = vld [vmem:[#allocation3 + $0x20] sm:$0xf]
    %v266 = vld [vmem:[#allocation3 + $0x24] sm:$0xff]
    %v267 = vld [vmem:[#allocation3 + $0x2c] sm:$0xf]
    %v268 = vld [vmem:[#allocation3 + $0x30] sm:$0xff]
    %v269 = vld [vmem:[#allocation3 + $0x38] sm:$0xf]
    %v270 = vld [vmem:[#allocation3 + $0x3c] sm:$0xff]
    %v271 = vld [vmem:[#allocation3 + $0x44] sm:$0xf]
    %v272 = vld [vmem:[#allocation3 + $0x48] sm:$0xff]
    %v273 = vld [vmem:[#allocation3 + $0x50] sm:$0xf]
    %v274 = vld [vmem:[#allocation3 + $0x54] sm:$0xff]
    %v275 = vld [vmem:[#allocation3 + $0x5c] sm:$0xf]
    %v276 = vld [vmem:[#allocation3 + $0x60] sm:$0xff]
    %v277 = vld [vmem:[#allocation3 + $0x68] sm:$0xf]
    %v278 = vld [vmem:[#allocation3 + $0x6c] sm:$0xff]
    %v279 = vld [vmem:[#allocation3 + $0x74] sm:$0xf]
    %v280 = vld [vmem:[#allocation3 + $0x78] sm:$0xff]
    %v281 = vld [vmem:[#allocation3 + $0x80] sm:$0xf]
    %v282 = vld [vmem:[#allocation3 + $0x84] sm:$0xff]
    %v283 = vld [vmem:[#allocation3 + $0x8c] sm:$0xf]
    %v284 = vld [vmem:[#allocation3 + $0x90] sm:$0xff]
    %v285 = vld [vmem:[#allocation3 + $0x98] sm:$0xf]
    %v286 = vld [vmem:[#allocation3 + $0x9c] sm:$0xff]
    %v287 = vld [vmem:[#allocation3 + $0xa4] sm:$0xf]
    %v288 = vld [vmem:[#allocation3 + $0xa8] sm:$0xff]
    %v289 = vld [vmem:[#allocation3 + $0xb0] sm:$0xf]
    %v290 = vld [vmem:[#allocation3 + $0xb4] sm:$0xff]
    %v291 = vld [vmem:[#allocation3 + $0xbc] sm:$0xf]
    %v292 = vld [vmem:[#allocation2] sm:$0xff]
    %v293 = vld [vmem:[#allocation2 + $0x8] sm:$0xff]
    %v294 = vld [vmem:[#allocation2 + $0x10] sm:$0xff]
    %v295 = vxor.u32 %v292, 2147483648
    %v296 = vxor.u32 %v293, 2147483648
    %v297 = vmul.f32 %v295, 1.442695
    %v298 = vpow.pop %v297
    %v299 = vmul.f32 %v296, 1.442695
    %v300 = vpow.pop %v299
    %v301 = vadd.f32 %v298, 1.0
    %v302 = vadd.f32 %v300, 1.0
    %v303 = vrcp.pop %v301
    %v304 = vmul.f32 1.0, %v303
    %v305 = vrcp.pop %v302
    %v306 = vmul.f32 1.0, %v305
    %v308 = vlaneseq
    %v309 = vshrl.u32 %v308, 7
    %v310 = vsub.s32 0, %v309
    %v311 = vrot.slane %v259, %v310
    %v313 = vmul.f32 %v304, %v311
    %v314 = vadd.f32 %v294, %v313
    %v315 = vtanh.pop %v314
    %v316 = vsub.f32 1.0, %v306
    %v317 = vmul.f32 %v316, %v315
    %v318 = vld [vmem:[#allocation2 + $0x18] sm:$0xff]
    %v319 = vld [vmem:[#allocation2 + $0x20] sm:$0xff]
    %v320 = vld [vmem:[#allocation2 + $0x28] sm:$0xff]
    %v321 = vpack.c.bf16 %v317, %v317
    %v354 = vunpack.c.l.b16 %v260
    %v355 = vunpack.c.h.b16 %v260
    %v356 = vunpack.c.l.b16 %v261
    %v357 = vunpack.c.l.b16 %v262
    %v358 = vunpack.c.h.b16 %v262
    %v359 = vunpack.c.l.b16 %v263
    %v360 = vunpack.c.l.b16 %v264
    %v361 = vunpack.c.h.b16 %v264
    %v362 = vunpack.c.l.b16 %v265
    %v363 = vunpack.c.l.b16 %v266
    %v364 = vunpack.c.h.b16 %v266
    %v365 = vunpack.c.l.b16 %v267
    %v366 = vunpack.c.l.b16 %v268
    %v367 = vunpack.c.h.b16 %v268
    %v368 = vunpack.c.l.b16 %v269
    %v369 = vunpack.c.l.b16 %v270
    %v370 = vunpack.c.h.b16 %v270
    %v371 = vunpack.c.l.b16 %v271
    %v372 = vunpack.c.l.b16 %v272
    %v373 = vunpack.c.h.b16 %v272
    %v374 = vunpack.c.l.b16 %v273
    %v375 = vunpack.c.l.b16 %v274
    %v376 = vunpack.c.h.b16 %v274
    %v377 = vunpack.c.l.b16 %v275
    %v378 = vunpack.c.l.b16 %v276
    %v379 = vunpack.c.h.b16 %v276
    %v380 = vunpack.c.l.b16 %v277
    %v381 = vunpack.c.l.b16 %v278
    %v382 = vunpack.c.h.b16 %v278
    %v383 = vunpack.c.l.b16 %v279
    %v384 = vunpack.c.l.b16 %v280
    %v385 = vunpack.c.h.b16 %v280
    %v386 = vunpack.c.l.b16 %v281
    %v387 = vunpack.c.l.b16 %v282
    %v388 = vunpack.c.h.b16 %v282
    %v389 = vunpack.c.l.b16 %v283
    %v390 = vunpack.c.l.b16 %v284
    %v391 = vunpack.c.h.b16 %v284
    %v392 = vunpack.c.l.b16 %v285
    %v393 = vunpack.c.l.b16 %v286
    %v394 = vunpack.c.h.b16 %v286
    %v395 = vunpack.c.l.b16 %v287
    %v396 = vunpack.c.l.b16 %v288
    %v397 = vunpack.c.h.b16 %v288
    %v398 = vunpack.c.l.b16 %v289
    %v399 = vunpack.c.l.b16 %v290
    %v400 = vunpack.c.h.b16 %v290
    %v401 = vunpack.c.l.b16 %v291
    %v402 = vpack.c.b16 %v357, %v354
    %v403 = vpack.c.b16 %v358, %v355
    %v404 = vpack.c.b16 %v359, %v356
    %v405 = vpack.c.b16 %v363, %v360
    %v406 = vpack.c.b16 %v364, %v361
    %v407 = vpack.c.b16 %v365, %v362
    %v408 = vpack.c.b16 %v369, %v366
    %v409 = vpack.c.b16 %v370, %v367
    %v410 = vpack.c.b16 %v371, %v368
    %v411 = vpack.c.b16 %v375, %v372
    %v412 = vpack.c.b16 %v376, %v373
    %v413 = vpack.c.b16 %v377, %v374
    %v414 = vpack.c.b16 %v381, %v378
    %v415 = vpack.c.b16 %v382, %v379
    %v416 = vpack.c.b16 %v383, %v380
    %v417 = vpack.c.b16 %v387, %v384
    %v418 = vpack.c.b16 %v388, %v385
    %v419 = vpack.c.b16 %v389, %v386
    %v420 = vpack.c.b16 %v393, %v390
    %v421 = vpack.c.b16 %v394, %v391
    %v422 = vpack.c.b16 %v395, %v392
    %v423 = vpack.c.b16 %v399, %v396
    %v424 = vpack.c.b16 %v400, %v397
    %v425 = vpack.c.b16 %v401, %v398
    %450 = vmatprep.subr.bf16.mxu0 %v403
    %451 = vmatpush1.bf16.msra.mxu0 %v402
    %452 = vmatprep.subr.bf16.mxu0 %v406
    %453 = vmatpush1.bf16.msra.mxu0 %v405
    %454 = vmatprep.subr.bf16.mxu0 %v409
    %455 = vmatpush1.bf16.msra.mxu0 %v408
    %456 = vmatprep.subr.bf16.mxu0 %v412
    %457 = vmatpush1.bf16.msra.mxu0 %v411
    %458 = vmatprep.subr.bf16.mxu0 %v415
    %459 = vmatpush1.bf16.msra.mxu0 %v414
    %460 = vmatprep.subr.bf16.mxu0 %v418
    %461 = vmatpush1.bf16.msra.mxu0 %v417
    %462 = vmatprep.subr.bf16.mxu0 %v421
    %463 = vmatpush1.bf16.msra.mxu0 %v420
    %464 = vmatprep.subr.bf16.mxu0 %v424
    %465 = vmatpush1.bf16.msra.mxu0 %v423
    %466 = vmatprep.subr.bf16.mxu0 0
    %467 = vmatpush1.bf16.msra.mxu0 0
    %468 = vmatprep.subr.bf16.mxu0 0
    %469 = vmatpush1.bf16.msra.mxu0 0
    %470 = vmatprep.subr.bf16.mxu0 0
    %471 = vmatpush1.bf16.msra.mxu0 0
    %472 = vmatprep.subr.bf16.mxu0 0
    %473 = vmatpush1.bf16.msra.mxu0 0
    %474 = vmatprep.subr.bf16.mxu0 0
    %475 = vmatpush1.bf16.msra.mxu0 0
    %476 = vmatprep.subr.bf16.mxu0 0
    %477 = vmatpush1.bf16.msra.mxu0 0
    %478 = vmatprep.subr.bf16.mxu0 0
    %479 = vmatpush1.bf16.msra.mxu0 0
    %480 = vmatprep.subr.bf16.mxu0 0
    %481 = vmatpush1.bf16.msra.mxu0 0
    %482 = vmatprep.mubr.bf16.mxu0 0
    %483 = vmatmul.mubr.bf16.gmra.mrb[0].mxu0 %v321
    %v484 = vpop.f32.mrb[0].mxu0
    %v485 = vadd.f32 0.0, %v484
    %v486 = vpop.f32.mrb[0].mxu0
    %v487 = vadd.f32 0.0, %v486
    %v488 = vpop.f32.mrb[0].mxu0
    %v489 = vpop.f32.mrb[0].mxu0
    %490 = vdwg.mxu0
    %491 = vmatprep.subr.bf16.mxu0 0
    %492 = vmatpush1.bf16.msra.mxu0 %v404
    %493 = vmatprep.subr.bf16.mxu0 0
    %494 = vmatpush1.bf16.msra.mxu0 %v407
    %495 = vmatprep.subr.bf16.mxu0 0
    %496 = vmatpush1.bf16.msra.mxu0 %v410
    %497 = vmatprep.subr.bf16.mxu0 0
    %498 = vmatpush1.bf16.msra.mxu0 %v413
    %499 = vmatprep.subr.bf16.mxu0 0
    %500 = vmatpush1.bf16.msra.mxu0 %v416
    %501 = vmatprep.subr.bf16.mxu0 0
    %502 = vmatpush1.bf16.msra.mxu0 %v419
    %503 = vmatprep.subr.bf16.mxu0 0
    %504 = vmatpush1.bf16.msra.mxu0 %v422
    %505 = vmatprep.subr.bf16.mxu0 0
    %506 = vmatpush1.bf16.msra.mxu0 %v425
    %507 = vmatprep.subr.bf16.mxu0 0
    %508 = vmatpush1.bf16.msra.mxu0 0
    %509 = vmatprep.subr.bf16.mxu0 0
    %510 = vmatpush1.bf16.msra.mxu0 0
    %511 = vmatprep.subr.bf16.mxu0 0
    %512 = vmatpush1.bf16.msra.mxu0 0
    %513 = vmatprep.subr.bf16.mxu0 0
    %514 = vmatpush1.bf16.msra.mxu0 0
    %515 = vmatprep.subr.bf16.mxu0 0
    %516 = vmatpush1.bf16.msra.mxu0 0
    %517 = vmatprep.subr.bf16.mxu0 0
    %518 = vmatpush1.bf16.msra.mxu0 0
    %519 = vmatprep.subr.bf16.mxu0 0
    %520 = vmatpush1.bf16.msra.mxu0 0
    %521 = vmatprep.subr.bf16.mxu0 0
    %522 = vmatpush1.bf16.msra.mxu0 0
    %523 = vmatprep.mubr.bf16.mxu0 0
    %524 = vmatmul.mubr.bf16.gmra.mrb[0].mxu0 %v321
    %v525 = vpop.f32.mrb[0].mxu0
    %v526 = vadd.f32 0.0, %v525
    %v527 = vpop.f32.mrb[0].mxu0
    %v528 = vpop.f32.mrb[0].mxu0
    %v529 = vpop.f32.mrb[0].mxu0
    %530 = vdwg.mxu0
    %v531 = vadd.f32 %v318, %v485
    %v532 = vadd.f32 %v319, %v487
    %v533 = vxor.u32 %v531, 2147483648
    %v534 = vxor.u32 %v532, 2147483648
    %v535 = vmul.f32 %v533, 1.442695
    %v536 = vpow.pop %v535
    %v537 = vmul.f32 %v534, 1.442695
    %v538 = vpow.pop %v537
    %v539 = vadd.f32 %v536, 1.0
    %v540 = vadd.f32 %v538, 1.0
    %v541 = vrcp.pop %v539
    %v542 = vmul.f32 1.0, %v541
    %v543 = vrcp.pop %v540
    %v544 = vmul.f32 1.0, %v543
    %v545 = vadd.f32 %v526, %v311
    %v546 = vmul.f32 %v542, %v545
    %v547 = vadd.f32 %v320, %v546
    %v548 = vtanh.pop %v547
    %v549 = vsub.f32 1.0, %v544
    %v550 = vmul.f32 %v549, %v548
    %v551 = vmul.f32 %v544, %v317
    %v552 = vadd.f32 %v550, %v551
    %v553 = vld [vmem:[#allocation2 + $0x30] sm:$0xff]
    %v554 = vld [vmem:[#allocation2 + $0x38] sm:$0xff]
    %v555 = vld [vmem:[#allocation2 + $0x40] sm:$0xff]
    %v556 = vpack.c.bf16 %v552, %v552
    %557 = vmatprep.subr.bf16.mxu0 %v403
    %558 = vmatpush1.bf16.msra.mxu0 %v402
    %559 = vmatprep.subr.bf16.mxu0 %v406
    %560 = vmatpush1.bf16.msra.mxu0 %v405
    %561 = vmatprep.subr.bf16.mxu0 %v409
    %562 = vmatpush1.bf16.msra.mxu0 %v408
    %563 = vmatprep.subr.bf16.mxu0 %v412
    %564 = vmatpush1.bf16.msra.mxu0 %v411
    %565 = vmatprep.subr.bf16.mxu0 %v415
    %566 = vmatpush1.bf16.msra.mxu0 %v414
    %567 = vmatprep.subr.bf16.mxu0 %v418
    %568 = vmatpush1.bf16.msra.mxu0 %v417
    %569 = vmatprep.subr.bf16.mxu0 %v421
    %570 = vmatpush1.bf16.msra.mxu0 %v420
    %571 = vmatprep.subr.bf16.mxu0 %v424
    %572 = vmatpush1.bf16.msra.mxu0 %v423
    %573 = vmatprep.subr.bf16.mxu0 0
    %574 = vmatpush1.bf16.msra.mxu0 0
    %575 = vmatprep.subr.bf16.mxu0 0
    %576 = vmatpush1.bf16.msra.mxu0 0
    %577 = vmatprep.subr.bf16.mxu0 0
    %578 = vmatpush1.bf16.msra.mxu0 0
    %579 = vmatprep.subr.bf16.mxu0 0
    %580 = vmatpush1.bf16.msra.mxu0 0
    %581 = vmatprep.subr.bf16.mxu0 0
    %582 = vmatpush1.bf16.msra.mxu0 0
    %583 = vmatprep.subr.bf16.mxu0 0
    %584 = vmatpush1.bf16.msra.mxu0 0
    %585 = vmatprep.subr.bf16.mxu0 0
    %586 = vmatpush1.bf16.msra.mxu0 0
    %587 = vmatprep.subr.bf16.mxu0 0
    %588 = vmatpush1.bf16.msra.mxu0 0
    %589 = vmatprep.mubr.bf16.mxu0 0
    %590 = vmatmul.mubr.bf16.gmra.mrb[0].mxu0 %v556
    %v591 = vpop.f32.mrb[0].mxu0
    %v592 = vadd.f32 0.0, %v591
    %v593 = vpop.f32.mrb[0].mxu0
    %v594 = vadd.f32 0.0, %v593
    %v595 = vpop.f32.mrb[0].mxu0
    %v596 = vpop.f32.mrb[0].mxu0
    %597 = vdwg.mxu0
    %598 = vmatprep.subr.bf16.mxu0 0
    %599 = vmatpush1.bf16.msra.mxu0 %v404
    %600 = vmatprep.subr.bf16.mxu0 0
    %601 = vmatpush1.bf16.msra.mxu0 %v407
    %602 = vmatprep.subr.bf16.mxu0 0
    %603 = vmatpush1.bf16.msra.mxu0 %v410
    %604 = vmatprep.subr.bf16.mxu0 0
    %605 = vmatpush1.bf16.msra.mxu0 %v413
    %606 = vmatprep.subr.bf16.mxu0 0
    %607 = vmatpush1.bf16.msra.mxu0 %v416
    %608 = vmatprep.subr.bf16.mxu0 0
    %609 = vmatpush1.bf16.msra.mxu0 %v419
    %610 = vmatprep.subr.bf16.mxu0 0
    %611 = vmatpush1.bf16.msra.mxu0 %v422
    %612 = vmatprep.subr.bf16.mxu0 0
    %613 = vmatpush1.bf16.msra.mxu0 %v425
    %614 = vmatprep.subr.bf16.mxu0 0
    %615 = vmatpush1.bf16.msra.mxu0 0
    %616 = vmatprep.subr.bf16.mxu0 0
    %617 = vmatpush1.bf16.msra.mxu0 0
    %618 = vmatprep.subr.bf16.mxu0 0
    %619 = vmatpush1.bf16.msra.mxu0 0
    %620 = vmatprep.subr.bf16.mxu0 0
    %621 = vmatpush1.bf16.msra.mxu0 0
    %622 = vmatprep.subr.bf16.mxu0 0
    %623 = vmatpush1.bf16.msra.mxu0 0
    %624 = vmatprep.subr.bf16.mxu0 0
    %625 = vmatpush1.bf16.msra.mxu0 0
    %626 = vmatprep.subr.bf16.mxu0 0
    %627 = vmatpush1.bf16.msra.mxu0 0
    %628 = vmatprep.subr.bf16.mxu0 0
    %629 = vmatpush1.bf16.msra.mxu0 0
    %630 = vmatprep.mubr.bf16.mxu0 0
    %631 = vmatmul.mubr.bf16.gmra.mrb[0].mxu0 %v556
    %v632 = vpop.f32.mrb[0].mxu0
    %v633 = vadd.f32 0.0, %v632
    %v634 = vpop.f32.mrb[0].mxu0
    %v635 = vpop.f32.mrb[0].mxu0
    %v636 = vpop.f32.mrb[0].mxu0
    %637 = vdwg.mxu0
    %v638 = vadd.f32 %v553, %v592
    %v639 = vadd.f32 %v554, %v594
    %v640 = vxor.u32 %v638, 2147483648
    %v641 = vxor.u32 %v639, 2147483648
    %v642 = vmul.f32 %v640, 1.442695
    %v643 = vpow.pop %v642
    %v644 = vmul.f32 %v641, 1.442695
    %v645 = vpow.pop %v644
    %v646 = vadd.f32 %v643, 1.0
    %v647 = vadd.f32 %v645, 1.0
    %v648 = vrcp.pop %v646
    %v649 = vmul.f32 1.0, %v648
    %v650 = vrcp.pop %v647
    %v651 = vmul.f32 1.0, %v650
    %v652 = vadd.f32 %v633, %v311
    %v653 = vmul.f32 %v649, %v652
    %v654 = vadd.f32 %v555, %v653
    %v655 = vtanh.pop %v654
    %v656 = vsub.f32 1.0, %v651
    %v657 = vmul.f32 %v656, %v655
    %v658 = vmul.f32 %v651, %v552
    %v659 = vadd.f32 %v657, %v658
    %v660 = vld [vmem:[#allocation2 + $0x48] sm:$0xff]
    %v661 = vld [vmem:[#allocation2 + $0x50] sm:$0xff]
    %v662 = vld [vmem:[#allocation2 + $0x58] sm:$0xff]
    %v663 = vpack.c.bf16 %v659, %v659
    %664 = vmatprep.subr.bf16.mxu0 %v403
    %665 = vmatpush1.bf16.msra.mxu0 %v402
    %666 = vmatprep.subr.bf16.mxu0 %v406
    %667 = vmatpush1.bf16.msra.mxu0 %v405
    %668 = vmatprep.subr.bf16.mxu0 %v409
    %669 = vmatpush1.bf16.msra.mxu0 %v408
    %670 = vmatprep.subr.bf16.mxu0 %v412
    %671 = vmatpush1.bf16.msra.mxu0 %v411
    %672 = vmatprep.subr.bf16.mxu0 %v415
    %673 = vmatpush1.bf16.msra.mxu0 %v414
    %674 = vmatprep.subr.bf16.mxu0 %v418
    %675 = vmatpush1.bf16.msra.mxu0 %v417
    %676 = vmatprep.subr.bf16.mxu0 %v421
    %677 = vmatpush1.bf16.msra.mxu0 %v420
    %678 = vmatprep.subr.bf16.mxu0 %v424
    %679 = vmatpush1.bf16.msra.mxu0 %v423
    %680 = vmatprep.subr.bf16.mxu0 0
    %681 = vmatpush1.bf16.msra.mxu0 0
    %682 = vmatprep.subr.bf16.mxu0 0
    %683 = vmatpush1.bf16.msra.mxu0 0
    %684 = vmatprep.subr.bf16.mxu0 0
    %685 = vmatpush1.bf16.msra.mxu0 0
    %686 = vmatprep.subr.bf16.mxu0 0
    %687 = vmatpush1.bf16.msra.mxu0 0
    %688 = vmatprep.subr.bf16.mxu0 0
    %689 = vmatpush1.bf16.msra.mxu0 0
    %690 = vmatprep.subr.bf16.mxu0 0
    %691 = vmatpush1.bf16.msra.mxu0 0
    %692 = vmatprep.subr.bf16.mxu0 0
    %693 = vmatpush1.bf16.msra.mxu0 0
    %694 = vmatprep.subr.bf16.mxu0 0
    %695 = vmatpush1.bf16.msra.mxu0 0
    %696 = vmatprep.mubr.bf16.mxu0 0
    %697 = vmatmul.mubr.bf16.gmra.mrb[0].mxu0 %v663
    %v698 = vpop.f32.mrb[0].mxu0
    %v699 = vadd.f32 0.0, %v698
    %v700 = vpop.f32.mrb[0].mxu0
    %v701 = vadd.f32 0.0, %v700
    %v702 = vpop.f32.mrb[0].mxu0
    %v703 = vpop.f32.mrb[0].mxu0
    %704 = vdwg.mxu0
    %705 = vmatprep.subr.bf16.mxu0 0
    %706 = vmatpush1.bf16.msra.mxu0 %v404
    %707 = vmatprep.subr.bf16.mxu0 0
    %708 = vmatpush1.bf16.msra.mxu0 %v407
    %709 = vmatprep.subr.bf16.mxu0 0
    %710 = vmatpush1.bf16.msra.mxu0 %v410
    %711 = vmatprep.subr.bf16.mxu0 0
    %712 = vmatpush1.bf16.msra.mxu0 %v413
    %713 = vmatprep.subr.bf16.mxu0 0
    %714 = vmatpush1.bf16.msra.mxu0 %v416
    %715 = vmatprep.subr.bf16.mxu0 0
    %716 = vmatpush1.bf16.msra.mxu0 %v419
    %717 = vmatprep.subr.bf16.mxu0 0
    %718 = vmatpush1.bf16.msra.mxu0 %v422
    %719 = vmatprep.subr.bf16.mxu0 0
    %720 = vmatpush1.bf16.msra.mxu0 %v425
    %721 = vmatprep.subr.bf16.mxu0 0
    %722 = vmatpush1.bf16.msra.mxu0 0
    %723 = vmatprep.subr.bf16.mxu0 0
    %724 = vmatpush1.bf16.msra.mxu0 0
    %725 = vmatprep.subr.bf16.mxu0 0
    %726 = vmatpush1.bf16.msra.mxu0 0
    %727 = vmatprep.subr.bf16.mxu0 0
    %728 = vmatpush1.bf16.msra.mxu0 0
    %729 = vmatprep.subr.bf16.mxu0 0
    %730 = vmatpush1.bf16.msra.mxu0 0
    %731 = vmatprep.subr.bf16.mxu0 0
    %732 = vmatpush1.bf16.msra.mxu0 0
    %733 = vmatprep.subr.bf16.mxu0 0
    %734 = vmatpush1.bf16.msra.mxu0 0
    %735 = vmatprep.subr.bf16.mxu0 0
    %736 = vmatpush1.bf16.msra.mxu0 0
    %737 = vmatprep.mubr.bf16.mxu0 0
    %738 = vmatmul.mubr.bf16.gmra.mrb[0].mxu0 %v663
    %v739 = vpop.f32.mrb[0].mxu0
    %v740 = vadd.f32 0.0, %v739
    %v741 = vpop.f32.mrb[0].mxu0
    %v742 = vpop.f32.mrb[0].mxu0
    %v743 = vpop.f32.mrb[0].mxu0
    %744 = vdwg.mxu0
    %v745 = vadd.f32 %v660, %v699
    %v746 = vadd.f32 %v661, %v701
    %v747 = vxor.u32 %v745, 2147483648
    %v748 = vxor.u32 %v746, 2147483648
    %v749 = vmul.f32 %v747, 1.442695
    %v750 = vpow.pop %v749
    %v751 = vmul.f32 %v748, 1.442695
    %v752 = vpow.pop %v751
    %v753 = vadd.f32 %v750, 1.0
    %v754 = vadd.f32 %v752, 1.0
    %v755 = vrcp.pop %v753
    %v756 = vmul.f32 1.0, %v755
    %v757 = vrcp.pop %v754
    %v758 = vmul.f32 1.0, %v757
    %v759 = vadd.f32 %v740, %v311
    %v760 = vmul.f32 %v756, %v759
    %v761 = vadd.f32 %v662, %v760
    %v762 = vtanh.pop %v761
    %v763 = vsub.f32 1.0, %v758
    %v764 = vmul.f32 %v763, %v762
    %v765 = vmul.f32 %v758, %v659
    %v766 = vadd.f32 %v764, %v765
    %v767 = vld [vmem:[#allocation2 + $0x60] sm:$0xff]
    %v768 = vld [vmem:[#allocation2 + $0x68] sm:$0xff]
    %v769 = vld [vmem:[#allocation2 + $0x70] sm:$0xff]
    %v770 = vpack.c.bf16 %v766, %v766
    %771 = vmatprep.subr.bf16.mxu0 %v403
    %772 = vmatpush1.bf16.msra.mxu0 %v402
    %773 = vmatprep.subr.bf16.mxu0 %v406
    %774 = vmatpush1.bf16.msra.mxu0 %v405
    %775 = vmatprep.subr.bf16.mxu0 %v409
    %776 = vmatpush1.bf16.msra.mxu0 %v408
    %777 = vmatprep.subr.bf16.mxu0 %v412
    %778 = vmatpush1.bf16.msra.mxu0 %v411
    %779 = vmatprep.subr.bf16.mxu0 %v415
    %780 = vmatpush1.bf16.msra.mxu0 %v414
    %781 = vmatprep.subr.bf16.mxu0 %v418
    %782 = vmatpush1.bf16.msra.mxu0 %v417
    %783 = vmatprep.subr.bf16.mxu0 %v421
    %784 = vmatpush1.bf16.msra.mxu0 %v420
    %785 = vmatprep.subr.bf16.mxu0 %v424
    %786 = vmatpush1.bf16.msra.mxu0 %v423
    %787 = vmatprep.subr.bf16.mxu0 0
    %788 = vmatpush1.bf16.msra.mxu0 0
    %789 = vmatprep.subr.bf16.mxu0 0
    %790 = vmatpush1.bf16.msra.mxu0 0
    %791 = vmatprep.subr.bf16.mxu0 0
    %792 = vmatpush1.bf16.msra.mxu0 0
    %793 = vmatprep.subr.bf16.mxu0 0
    %794 = vmatpush1.bf16.msra.mxu0 0
    %795 = vmatprep.subr.bf16.mxu0 0
    %796 = vmatpush1.bf16.msra.mxu0 0
    %797 = vmatprep.subr.bf16.mxu0 0
    %798 = vmatpush1.bf16.msra.mxu0 0
    %799 = vmatprep.subr.bf16.mxu0 0
    %800 = vmatpush1.bf16.msra.mxu0 0
    %801 = vmatprep.subr.bf16.mxu0 0
    %802 = vmatpush1.bf16.msra.mxu0 0
    %803 = vmatprep.mubr.bf16.mxu0 0
    %804 = vmatmul.mubr.bf16.gmra.mrb[0].mxu0 %v770
    %v805 = vpop.f32.mrb[0].mxu0
    %v806 = vadd.f32 0.0, %v805
    %v807 = vpop.f32.mrb[0].mxu0
    %v808 = vadd.f32 0.0, %v807
    %v809 = vpop.f32.mrb[0].mxu0
    %v810 = vpop.f32.mrb[0].mxu0
    %811 = vdwg.mxu0
    %812 = vmatprep.subr.bf16.mxu0 0
    %813 = vmatpush1.bf16.msra.mxu0 %v404
    %814 = vmatprep.subr.bf16.mxu0 0
    %815 = vmatpush1.bf16.msra.mxu0 %v407
    %816 = vmatprep.subr.bf16.mxu0 0
    %817 = vmatpush1.bf16.msra.mxu0 %v410
    %818 = vmatprep.subr.bf16.mxu0 0
    %819 = vmatpush1.bf16.msra.mxu0 %v413
    %820 = vmatprep.subr.bf16.mxu0 0
    %821 = vmatpush1.bf16.msra.mxu0 %v416
    %822 = vmatprep.subr.bf16.mxu0 0
    %823 = vmatpush1.bf16.msra.mxu0 %v419
    %824 = vmatprep.subr.bf16.mxu0 0
    %825 = vmatpush1.bf16.msra.mxu0 %v422
    %826 = vmatprep.subr.bf16.mxu0 0
    %827 = vmatpush1.bf16.msra.mxu0 %v425
    %828 = vmatprep.subr.bf16.mxu0 0
    %829 = vmatpush1.bf16.msra.mxu0 0
    %830 = vmatprep.subr.bf16.mxu0 0
    %831 = vmatpush1.bf16.msra.mxu0 0
    %832 = vmatprep.subr.bf16.mxu0 0
    %833 = vmatpush1.bf16.msra.mxu0 0
    %834 = vmatprep.subr.bf16.mxu0 0
    %835 = vmatpush1.bf16.msra.mxu0 0
    %836 = vmatprep.subr.bf16.mxu0 0
    %837 = vmatpush1.bf16.msra.mxu0 0
    %838 = vmatprep.subr.bf16.mxu0 0
    %839 = vmatpush1.bf16.msra.mxu0 0
    %840 = vmatprep.subr.bf16.mxu0 0
    %841 = vmatpush1.bf16.msra.mxu0 0
    %842 = vmatprep.subr.bf16.mxu0 0
    %843 = vmatpush1.bf16.msra.mxu0 0
    %844 = vmatprep.mubr.bf16.mxu0 0
    %845 = vmatmul.mubr.bf16.gmra.mrb[0].mxu0 %v770
    %v846 = vpop.f32.mrb[0].mxu0
    %v847 = vadd.f32 0.0, %v846
    %v848 = vpop.f32.mrb[0].mxu0
    %v849 = vpop.f32.mrb[0].mxu0
    %v850 = vpop.f32.mrb[0].mxu0
    %851 = vdwg.mxu0
    %v852 = vadd.f32 %v767, %v806
    %v853 = vadd.f32 %v768, %v808
    %v854 = vxor.u32 %v852, 2147483648
    %v855 = vxor.u32 %v853, 2147483648
    %v856 = vmul.f32 %v854, 1.442695
    %v857 = vpow.pop %v856
    %v858 = vmul.f32 %v855, 1.442695
    %v859 = vpow.pop %v858
    %v860 = vadd.f32 %v857, 1.0
    %v861 = vadd.f32 %v859, 1.0
    %v862 = vrcp.pop %v860
    %v863 = vmul.f32 1.0, %v862
    %v864 = vrcp.pop %v861
    %v865 = vmul.f32 1.0, %v864
    %v866 = vadd.f32 %v847, %v311
    %v867 = vmul.f32 %v863, %v866
    %v868 = vadd.f32 %v769, %v867
    %v869 = vtanh.pop %v868
    %v870 = vsub.f32 1.0, %v865
    %v871 = vmul.f32 %v870, %v869
    %v872 = vmul.f32 %v865, %v766
    %v873 = vadd.f32 %v871, %v872
    %v874 = vld [vmem:[#allocation2 + $0x78] sm:$0xff]
    %v875 = vld [vmem:[#allocation2 + $0x80] sm:$0xff]
    %v876 = vld [vmem:[#allocation2 + $0x88] sm:$0xff]
    %v877 = vpack.c.bf16 %v873, %v873
    %878 = vmatprep.subr.bf16.mxu0 %v403
    %879 = vmatpush1.bf16.msra.mxu0 %v402
    %880 = vmatprep.subr.bf16.mxu0 %v406
    %881 = vmatpush1.bf16.msra.mxu0 %v405
    %882 = vmatprep.subr.bf16.mxu0 %v409
    %883 = vmatpush1.bf16.msra.mxu0 %v408
    %884 = vmatprep.subr.bf16.mxu0 %v412
    %885 = vmatpush1.bf16.msra.mxu0 %v411
    %886 = vmatprep.subr.bf16.mxu0 %v415
    %887 = vmatpush1.bf16.msra.mxu0 %v414
    %888 = vmatprep.subr.bf16.mxu0 %v418
    %889 = vmatpush1.bf16.msra.mxu0 %v417
    %890 = vmatprep.subr.bf16.mxu0 %v421
    %891 = vmatpush1.bf16.msra.mxu0 %v420
    %892 = vmatprep.subr.bf16.mxu0 %v424
    %893 = vmatpush1.bf16.msra.mxu0 %v423
    %894 = vmatprep.subr.bf16.mxu0 0
    %895 = vmatpush1.bf16.msra.mxu0 0
    %896 = vmatprep.subr.bf16.mxu0 0
    %897 = vmatpush1.bf16.msra.mxu0 0
    %898 = vmatprep.subr.bf16.mxu0 0
    %899 = vmatpush1.bf16.msra.mxu0 0
    %900 = vmatprep.subr.bf16.mxu0 0
    %901 = vmatpush1.bf16.msra.mxu0 0
    %902 = vmatprep.subr.bf16.mxu0 0
    %903 = vmatpush1.bf16.msra.mxu0 0
    %904 = vmatprep.subr.bf16.mxu0 0
    %905 = vmatpush1.bf16.msra.mxu0 0
    %906 = vmatprep.subr.bf16.mxu0 0
    %907 = vmatpush1.bf16.msra.mxu0 0
    %908 = vmatprep.subr.bf16.mxu0 0
    %909 = vmatpush1.bf16.msra.mxu0 0
    %910 = vmatprep.mubr.bf16.mxu0 0
    %911 = vmatmul.mubr.bf16.gmra.mrb[0].mxu0 %v877
    %v912 = vpop.f32.mrb[0].mxu0
    %v913 = vadd.f32 0.0, %v912
    %v914 = vpop.f32.mrb[0].mxu0
    %v915 = vadd.f32 0.0, %v914
    %v916 = vpop.f32.mrb[0].mxu0
    %v917 = vpop.f32.mrb[0].mxu0
    %918 = vdwg.mxu0
    %919 = vmatprep.subr.bf16.mxu0 0
    %920 = vmatpush1.bf16.msra.mxu0 %v404
    %921 = vmatprep.subr.bf16.mxu0 0
    %922 = vmatpush1.bf16.msra.mxu0 %v407
    %923 = vmatprep.subr.bf16.mxu0 0
    %924 = vmatpush1.bf16.msra.mxu0 %v410
    %925 = vmatprep.subr.bf16.mxu0 0
    %926 = vmatpush1.bf16.msra.mxu0 %v413
    %927 = vmatprep.subr.bf16.mxu0 0
    %928 = vmatpush1.bf16.msra.mxu0 %v416
    %929 = vmatprep.subr.bf16.mxu0 0
    %930 = vmatpush1.bf16.msra.mxu0 %v419
    %931 = vmatprep.subr.bf16.mxu0 0
    %932 = vmatpush1.bf16.msra.mxu0 %v422
    %933 = vmatprep.subr.bf16.mxu0 0
    %934 = vmatpush1.bf16.msra.mxu0 %v425
    %935 = vmatprep.subr.bf16.mxu0 0
    %936 = vmatpush1.bf16.msra.mxu0 0
    %937 = vmatprep.subr.bf16.mxu0 0
    %938 = vmatpush1.bf16.msra.mxu0 0
    %939 = vmatprep.subr.bf16.mxu0 0
    %940 = vmatpush1.bf16.msra.mxu0 0
    %941 = vmatprep.subr.bf16.mxu0 0
    %942 = vmatpush1.bf16.msra.mxu0 0
    %943 = vmatprep.subr.bf16.mxu0 0
    %944 = vmatpush1.bf16.msra.mxu0 0
    %945 = vmatprep.subr.bf16.mxu0 0
    %946 = vmatpush1.bf16.msra.mxu0 0
    %947 = vmatprep.subr.bf16.mxu0 0
    %948 = vmatpush1.bf16.msra.mxu0 0
    %949 = vmatprep.subr.bf16.mxu0 0
    %950 = vmatpush1.bf16.msra.mxu0 0
    %951 = vmatprep.mubr.bf16.mxu0 0
    %952 = vmatmul.mubr.bf16.gmra.mrb[0].mxu0 %v877
    %v953 = vpop.f32.mrb[0].mxu0
    %v954 = vadd.f32 0.0, %v953
    %v955 = vpop.f32.mrb[0].mxu0
    %v956 = vpop.f32.mrb[0].mxu0
    %v957 = vpop.f32.mrb[0].mxu0
    %958 = vdwg.mxu0
    %v959 = vadd.f32 %v874, %v913
    %v960 = vadd.f32 %v875, %v915
    %v961 = vxor.u32 %v959, 2147483648
    %v962 = vxor.u32 %v960, 2147483648
    %v963 = vmul.f32 %v961, 1.442695
    %v964 = vpow.pop %v963
    %v965 = vmul.f32 %v962, 1.442695
    %v966 = vpow.pop %v965
    %v967 = vadd.f32 %v964, 1.0
    %v968 = vadd.f32 %v966, 1.0
    %v969 = vrcp.pop %v967
    %v970 = vmul.f32 1.0, %v969
    %v971 = vrcp.pop %v968
    %v972 = vmul.f32 1.0, %v971
    %v973 = vadd.f32 %v954, %v311
    %v974 = vmul.f32 %v970, %v973
    %v975 = vadd.f32 %v876, %v974
    %v976 = vtanh.pop %v975
    %v977 = vsub.f32 1.0, %v972
    %v978 = vmul.f32 %v977, %v976
    %v979 = vmul.f32 %v972, %v873
    %v980 = vadd.f32 %v978, %v979
    %v981 = vld [vmem:[#allocation2 + $0x90] sm:$0xff]
    %v982 = vld [vmem:[#allocation2 + $0x98] sm:$0xff]
    %v983 = vld [vmem:[#allocation2 + $0xa0] sm:$0xff]
    %v984 = vpack.c.bf16 %v980, %v980
    %985 = vmatprep.subr.bf16.mxu0 %v403
    %986 = vmatpush1.bf16.msra.mxu0 %v402
    %987 = vmatprep.subr.bf16.mxu0 %v406
    %988 = vmatpush1.bf16.msra.mxu0 %v405
    %989 = vmatprep.subr.bf16.mxu0 %v409
    %990 = vmatpush1.bf16.msra.mxu0 %v408
    %991 = vmatprep.subr.bf16.mxu0 %v412
    %992 = vmatpush1.bf16.msra.mxu0 %v411
    %993 = vmatprep.subr.bf16.mxu0 %v415
    %994 = vmatpush1.bf16.msra.mxu0 %v414
    %995 = vmatprep.subr.bf16.mxu0 %v418
    %996 = vmatpush1.bf16.msra.mxu0 %v417
    %997 = vmatprep.subr.bf16.mxu0 %v421
    %998 = vmatpush1.bf16.msra.mxu0 %v420
    %999 = vmatprep.subr.bf16.mxu0 %v424
    %1000 = vmatpush1.bf16.msra.mxu0 %v423
    %1001 = vmatprep.subr.bf16.mxu0 0
    %1002 = vmatpush1.bf16.msra.mxu0 0
    %1003 = vmatprep.subr.bf16.mxu0 0
    %1004 = vmatpush1.bf16.msra.mxu0 0
    %1005 = vmatprep.subr.bf16.mxu0 0
    %1006 = vmatpush1.bf16.msra.mxu0 0
    %1007 = vmatprep.subr.bf16.mxu0 0
    %1008 = vmatpush1.bf16.msra.mxu0 0
    %1009 = vmatprep.subr.bf16.mxu0 0
    %1010 = vmatpush1.bf16.msra.mxu0 0
    %1011 = vmatprep.subr.bf16.mxu0 0
    %1012 = vmatpush1.bf16.msra.mxu0 0
    %1013 = vmatprep.subr.bf16.mxu0 0
    %1014 = vmatpush1.bf16.msra.mxu0 0
    %1015 = vmatprep.subr.bf16.mxu0 0
    %1016 = vmatpush1.bf16.msra.mxu0 0
    %1017 = vmatprep.mubr.bf16.mxu0 0
    %1018 = vmatmul.mubr.bf16.gmra.mrb[0].mxu0 %v984
    %v1019 = vpop.f32.mrb[0].mxu0
    %v1020 = vadd.f32 0.0, %v1019
    %v1021 = vpop.f32.mrb[0].mxu0
    %v1022 = vadd.f32 0.0, %v1021
    %v1023 = vpop.f32.mrb[0].mxu0
    %v1024 = vpop.f32.mrb[0].mxu0
    %1025 = vdwg.mxu0
    %1026 = vmatprep.subr.bf16.mxu0 0
    %1027 = vmatpush1.bf16.msra.mxu0 %v404
    %1028 = vmatprep.subr.bf16.mxu0 0
    %1029 = vmatpush1.bf16.msra.mxu0 %v407
    %1030 = vmatprep.subr.bf16.mxu0 0
    %1031 = vmatpush1.bf16.msra.mxu0 %v410
    %1032 = vmatprep.subr.bf16.mxu0 0
    %1033 = vmatpush1.bf16.msra.mxu0 %v413
    %1034 = vmatprep.subr.bf16.mxu0 0
    %1035 = vmatpush1.bf16.msra.mxu0 %v416
    %1036 = vmatprep.subr.bf16.mxu0 0
    %1037 = vmatpush1.bf16.msra.mxu0 %v419
    %1038 = vmatprep.subr.bf16.mxu0 0
    %1039 = vmatpush1.bf16.msra.mxu0 %v422
    %1040 = vmatprep.subr.bf16.mxu0 0
    %1041 = vmatpush1.bf16.msra.mxu0 %v425
    %1042 = vmatprep.subr.bf16.mxu0 0
    %1043 = vmatpush1.bf16.msra.mxu0 0
    %1044 = vmatprep.subr.bf16.mxu0 0
    %1045 = vmatpush1.bf16.msra.mxu0 0
    %1046 = vmatprep.subr.bf16.mxu0 0
    %1047 = vmatpush1.bf16.msra.mxu0 0
    %1048 = vmatprep.subr.bf16.mxu0 0
    %1049 = vmatpush1.bf16.msra.mxu0 0
    %1050 = vmatprep.subr.bf16.mxu0 0
    %1051 = vmatpush1.bf16.msra.mxu0 0
    %1052 = vmatprep.subr.bf16.mxu0 0
    %1053 = vmatpush1.bf16.msra.mxu0 0
    %1054 = vmatprep.subr.bf16.mxu0 0
    %1055 = vmatpush1.bf16.msra.mxu0 0
    %1056 = vmatprep.subr.bf16.mxu0 0
    %1057 = vmatpush1.bf16.msra.mxu0 0
    %1058 = vmatprep.mubr.bf16.mxu0 0
    %1059 = vmatmul.mubr.bf16.gmra.mrb[0].mxu0 %v984
    %v1060 = vpop.f32.mrb[0].mxu0
    %v1061 = vadd.f32 0.0, %v1060
    %v1062 = vpop.f32.mrb[0].mxu0
    %v1063 = vpop.f32.mrb[0].mxu0
    %v1064 = vpop.f32.mrb[0].mxu0
    %1065 = vdwg.mxu0
    %v1066 = vadd.f32 %v981, %v1020
    %v1067 = vadd.f32 %v982, %v1022
    %v1068 = vxor.u32 %v1066, 2147483648
    %v1069 = vxor.u32 %v1067, 2147483648
    %v1070 = vmul.f32 %v1068, 1.442695
    %v1071 = vpow.pop %v1070
    %v1072 = vmul.f32 %v1069, 1.442695
    %v1073 = vpow.pop %v1072
    %v1074 = vadd.f32 %v1071, 1.0
    %v1075 = vadd.f32 %v1073, 1.0
    %v1076 = vrcp.pop %v1074
    %v1077 = vmul.f32 1.0, %v1076
    %v1078 = vrcp.pop %v1075
    %v1079 = vmul.f32 1.0, %v1078
    %v1080 = vadd.f32 %v1061, %v311
    %v1081 = vmul.f32 %v1077, %v1080
    %v1082 = vadd.f32 %v983, %v1081
    %v1083 = vtanh.pop %v1082
    %v1084 = vsub.f32 1.0, %v1079
    %v1085 = vmul.f32 %v1084, %v1083
    %v1086 = vmul.f32 %v1079, %v980
    %v1087 = vadd.f32 %v1085, %v1086
    %v1088 = vld [vmem:[#allocation2 + $0xa8] sm:$0xff]
    %v1089 = vld [vmem:[#allocation2 + $0xb0] sm:$0xff]
    %v1090 = vld [vmem:[#allocation2 + $0xb8] sm:$0xff]
    %v1091 = vpack.c.bf16 %v1087, %v1087
    %1092 = vmatprep.subr.bf16.mxu0 %v403
    %1093 = vmatpush1.bf16.msra.mxu0 %v402
    %1094 = vmatprep.subr.bf16.mxu0 %v406
    %1095 = vmatpush1.bf16.msra.mxu0 %v405
    %1096 = vmatprep.subr.bf16.mxu0 %v409
    %1097 = vmatpush1.bf16.msra.mxu0 %v408
    %1098 = vmatprep.subr.bf16.mxu0 %v412
    %1099 = vmatpush1.bf16.msra.mxu0 %v411
    %1100 = vmatprep.subr.bf16.mxu0 %v415
    %1101 = vmatpush1.bf16.msra.mxu0 %v414
    %1102 = vmatprep.subr.bf16.mxu0 %v418
    %1103 = vmatpush1.bf16.msra.mxu0 %v417
    %1104 = vmatprep.subr.bf16.mxu0 %v421
    %1105 = vmatpush1.bf16.msra.mxu0 %v420
    %1106 = vmatprep.subr.bf16.mxu0 %v424
    %1107 = vmatpush1.bf16.msra.mxu0 %v423
    %1108 = vmatprep.subr.bf16.mxu0 0
    %1109 = vmatpush1.bf16.msra.mxu0 0
    %1110 = vmatprep.subr.bf16.mxu0 0
    %1111 = vmatpush1.bf16.msra.mxu0 0
    %1112 = vmatprep.subr.bf16.mxu0 0
    %1113 = vmatpush1.bf16.msra.mxu0 0
    %1114 = vmatprep.subr.bf16.mxu0 0
    %1115 = vmatpush1.bf16.msra.mxu0 0
    %1116 = vmatprep.subr.bf16.mxu0 0
    %1117 = vmatpush1.bf16.msra.mxu0 0
    %1118 = vmatprep.subr.bf16.mxu0 0
    %1119 = vmatpush1.bf16.msra.mxu0 0
    %1120 = vmatprep.subr.bf16.mxu0 0
    %1121 = vmatpush1.bf16.msra.mxu0 0
    %1122 = vmatprep.subr.bf16.mxu0 0
    %1123 = vmatpush1.bf16.msra.mxu0 0
    %1124 = vmatprep.mubr.bf16.mxu0 0
    %1125 = vmatmul.mubr.bf16.gmra.mrb[0].mxu0 %v1091
    %v1126 = vpop.f32.mrb[0].mxu0
    %v1127 = vadd.f32 0.0, %v1126
    %v1128 = vpop.f32.mrb[0].mxu0
    %v1129 = vadd.f32 0.0, %v1128
    %v1130 = vpop.f32.mrb[0].mxu0
    %v1131 = vpop.f32.mrb[0].mxu0
    %1132 = vdwg.mxu0
    %1133 = vmatprep.subr.bf16.mxu0 0
    %1134 = vmatpush1.bf16.msra.mxu0 %v404
    %1135 = vmatprep.subr.bf16.mxu0 0
    %1136 = vmatpush1.bf16.msra.mxu0 %v407
    %1137 = vmatprep.subr.bf16.mxu0 0
    %1138 = vmatpush1.bf16.msra.mxu0 %v410
    %1139 = vmatprep.subr.bf16.mxu0 0
    %1140 = vmatpush1.bf16.msra.mxu0 %v413
    %1141 = vmatprep.subr.bf16.mxu0 0
    %1142 = vmatpush1.bf16.msra.mxu0 %v416
    %1143 = vmatprep.subr.bf16.mxu0 0
    %1144 = vmatpush1.bf16.msra.mxu0 %v419
    %1145 = vmatprep.subr.bf16.mxu0 0
    %1146 = vmatpush1.bf16.msra.mxu0 %v422
    %1147 = vmatprep.subr.bf16.mxu0 0
    %1148 = vmatpush1.bf16.msra.mxu0 %v425
    %1149 = vmatprep.subr.bf16.mxu0 0
    %1150 = vmatpush1.bf16.msra.mxu0 0
    %1151 = vmatprep.subr.bf16.mxu0 0
    %1152 = vmatpush1.bf16.msra.mxu0 0
    %1153 = vmatprep.subr.bf16.mxu0 0
    %1154 = vmatpush1.bf16.msra.mxu0 0
    %1155 = vmatprep.subr.bf16.mxu0 0
    %1156 = vmatpush1.bf16.msra.mxu0 0
    %1157 = vmatprep.subr.bf16.mxu0 0
    %1158 = vmatpush1.bf16.msra.mxu0 0
    %1159 = vmatprep.subr.bf16.mxu0 0
    %1160 = vmatpush1.bf16.msra.mxu0 0
    %1161 = vmatprep.subr.bf16.mxu0 0
    %1162 = vmatpush1.bf16.msra.mxu0 0
    %1163 = vmatprep.subr.bf16.mxu0 0
    %1164 = vmatpush1.bf16.msra.mxu0 0
    %1165 = vmatprep.mubr.bf16.mxu0 0
    %1166 = vmatmul.mubr.bf16.gmra.mrb[0].mxu0 %v1091
    %v1167 = vpop.f32.mrb[0].mxu0
    %v1168 = vadd.f32 0.0, %v1167
    %v1169 = vpop.f32.mrb[0].mxu0
    %v1170 = vpop.f32.mrb[0].mxu0
    %v1171 = vpop.f32.mrb[0].mxu0
    %1172 = vdwg.mxu0
    %v1173 = vadd.f32 %v1088, %v1127
    %v1174 = vadd.f32 %v1089, %v1129
    %v1175 = vxor.u32 %v1173, 2147483648
    %v1176 = vxor.u32 %v1174, 2147483648
    %v1177 = vmul.f32 %v1175, 1.442695
    %v1178 = vpow.pop %v1177
    %v1179 = vmul.f32 %v1176, 1.442695
    %v1180 = vpow.pop %v1179
    %v1181 = vadd.f32 %v1178, 1.0
    %v1182 = vadd.f32 %v1180, 1.0
    %v1183 = vrcp.pop %v1181
    %v1184 = vmul.f32 1.0, %v1183
    %v1185 = vrcp.pop %v1182
    %v1186 = vmul.f32 1.0, %v1185
    %v1187 = vadd.f32 %v1168, %v311
    %v1188 = vmul.f32 %v1184, %v1187
    %v1189 = vadd.f32 %v1090, %v1188
    %v1190 = vtanh.pop %v1189
    %v1191 = vsub.f32 1.0, %v1186
    %v1192 = vmul.f32 %v1191, %v1190
    %v1193 = vmul.f32 %v1186, %v1087
    %v1194 = vadd.f32 %v1192, %v1193
    %v1195 = vld [vmem:[%s0 + $0x38] sm:$0xff]
    %v1196 = vpack.c.bf16 %v1195, %v1195
    %v1197 = vld [vmem:[%s4 + $0x3] sm:$0x7]
    %v1198 = vld [vmem:[%s2] sm:$0xff]
    %v1199 = vld [vmem:[%s2 + $0x8] sm:$0xf]
    %v1200 = vld [vmem:[%s2 + $0xc] sm:$0xff]
    %v1201 = vld [vmem:[%s2 + $0x14] sm:$0xf]
    %v1203 = vlaneseq
    %v1204 = vshrl.u32 %v1203, 7
    %v1205 = vsub.s32 0, %v1204
    %v1206 = vrot.slane %v1197, %v1205
    %v1207 = vlaneseq
    %v1208 = vshrl.u32 %v1207, 7
    %v1209 = vsub.s32 1, %v1208
    %v1210 = vrot.slane %v1197, %v1209
    %v1211 = vlaneseq
    %v1212 = vshrl.u32 %v1211, 7
    %v1213 = vsub.s32 2, %v1212
    %v1214 = vrot.slane %v1197, %v1213
    %v1222 = vunpack.c.l.b16 %v1198
    %v1223 = vunpack.c.h.b16 %v1198
    %v1224 = vunpack.c.l.b16 %v1199
    %v1225 = vunpack.c.l.b16 %v1200
    %v1226 = vunpack.c.h.b16 %v1200
    %v1227 = vunpack.c.l.b16 %v1201
    %v1228 = vpack.c.b16 %v1225, %v1222
    %v1229 = vpack.c.b16 %v1226, %v1223
    %v1230 = vpack.c.b16 %v1227, %v1224
    %v1235 = vsel %vm84, %v1196, 0
    %1237 = vmatprep.subr.bf16.mxu0 %v1229
    %1238 = vmatpush1.bf16.msra.mxu0 %v1228
    %1239 = vmatprep.subr.bf16.mxu0 0
    %1240 = vmatpush1.bf16.msra.mxu0 0
    %1241 = vmatprep.subr.bf16.mxu0 0
    %1242 = vmatpush1.bf16.msra.mxu0 0
    %1243 = vmatprep.subr.bf16.mxu0 0
    %1244 = vmatpush1.bf16.msra.mxu0 0
    %1245 = vmatprep.subr.bf16.mxu0 0
    %1246 = vmatpush1.bf16.msra.mxu0 0
    %1247 = vmatprep.subr.bf16.mxu0 0
    %1248 = vmatpush1.bf16.msra.mxu0 0
    %1249 = vmatprep.subr.bf16.mxu0 0
    %1250 = vmatpush1.bf16.msra.mxu0 0
    %1251 = vmatprep.subr.bf16.mxu0 0
    %1252 = vmatpush1.bf16.msra.mxu0 0
    %1253 = vmatprep.subr.bf16.mxu0 0
    %1254 = vmatpush1.bf16.msra.mxu0 0
    %1255 = vmatprep.subr.bf16.mxu0 0
    %1256 = vmatpush1.bf16.msra.mxu0 0
    %1257 = vmatprep.subr.bf16.mxu0 0
    %1258 = vmatpush1.bf16.msra.mxu0 0
    %1259 = vmatprep.subr.bf16.mxu0 0
    %1260 = vmatpush1.bf16.msra.mxu0 0
    %1261 = vmatprep.subr.bf16.mxu0 0
    %1262 = vmatpush1.bf16.msra.mxu0 0
    %1263 = vmatprep.subr.bf16.mxu0 0
    %1264 = vmatpush1.bf16.msra.mxu0 0
    %1265 = vmatprep.subr.bf16.mxu0 0
    %1266 = vmatpush1.bf16.msra.mxu0 0
    %1267 = vmatprep.subr.bf16.mxu0 0
    %1268 = vmatpush1.bf16.msra.mxu0 0
    %1269 = vmatprep.mubr.bf16.mxu0 0
    %1270 = vmatmul.mubr.bf16.gmra.mrb[0].mxu0 %v1235
    %v1271 = vpop.f32.mrb[0].mxu0
    %v1272 = vadd.f32 %v1206, %v1271
    %v1273 = vpop.f32.mrb[0].mxu0
    %v1274 = vadd.f32 %v1210, %v1273
    %v1275 = vpop.f32.mrb[0].mxu0
    %v1276 = vpop.f32.mrb[0].mxu0
    %1277 = vdwg.mxu0
    %1278 = vmatprep.subr.bf16.mxu0 0
    %1279 = vmatpush1.bf16.msra.mxu0 %v1230
    %1280 = vmatprep.subr.bf16.mxu0 0
    %1281 = vmatpush1.bf16.msra.mxu0 0
    %1282 = vmatprep.subr.bf16.mxu0 0
    %1283 = vmatpush1.bf16.msra.mxu0 0
    %1284 = vmatprep.subr.bf16.mxu0 0
    %1285 = vmatpush1.bf16.msra.mxu0 0
    %1286 = vmatprep.subr.bf16.mxu0 0
    %1287 = vmatpush1.bf16.msra.mxu0 0
    %1288 = vmatprep.subr.bf16.mxu0 0
    %1289 = vmatpush1.bf16.msra.mxu0 0
    %1290 = vmatprep.subr.bf16.mxu0 0
    %1291 = vmatpush1.bf16.msra.mxu0 0
    %1292 = vmatprep.subr.bf16.mxu0 0
    %1293 = vmatpush1.bf16.msra.mxu0 0
    %1294 = vmatprep.subr.bf16.mxu0 0
    %1295 = vmatpush1.bf16.msra.mxu0 0
    %1296 = vmatprep.subr.bf16.mxu0 0
    %1297 = vmatpush1.bf16.msra.mxu0 0
    %1298 = vmatprep.subr.bf16.mxu0 0
    %1299 = vmatpush1.bf16.msra.mxu0 0
    %1300 = vmatprep.subr.bf16.mxu0 0
    %1301 = vmatpush1.bf16.msra.mxu0 0
    %1302 = vmatprep.subr.bf16.mxu0 0
    %1303 = vmatpush1.bf16.msra.mxu0 0
    %1304 = vmatprep.subr.bf16.mxu0 0
    %1305 = vmatpush1.bf16.msra.mxu0 0
    %1306 = vmatprep.subr.bf16.mxu0 0
    %1307 = vmatpush1.bf16.msra.mxu0 0
    %1308 = vmatprep.subr.bf16.mxu0 0
    %1309 = vmatpush1.bf16.msra.mxu0 0
    %1310 = vmatprep.mubr.bf16.mxu0 0
    %1311 = vmatmul.mubr.bf16.gmra.mrb[0].mxu0 %v1235
    %v1312 = vpop.f32.mrb[0].mxu0
    %v1313 = vadd.f32 %v1214, %v1312
    %v1314 = vpop.f32.mrb[0].mxu0
    %v1315 = vpop.f32.mrb[0].mxu0
    %v1316 = vpop.f32.mrb[0].mxu0
    %1317 = vdwg.mxu0
    %v1318 = vld [vmem:[%s4 + $0x7] sm:$0x1]
    %v1319 = vxor.u32 %v1272, 2147483648
    %v1320 = vxor.u32 %v1274, 2147483648
    %v1321 = vmul.f32 %v1319, 1.442695
    %v1322 = vpow.pop %v1321
    %v1323 = vmul.f32 %v1320, 1.442695
    %v1324 = vpow.pop %v1323
    %v1325 = vadd.f32 %v1322, 1.0
    %v1326 = vadd.f32 %v1324, 1.0
    %v1327 = vrcp.pop %v1325
    %v1328 = vmul.f32 1.0, %v1327
    %v1329 = vrcp.pop %v1326
    %v1330 = vmul.f32 1.0, %v1329
    %v1332 = vlaneseq
    %v1333 = vshrl.u32 %v1332, 7
    %v1334 = vsub.s32 0, %v1333
    %v1335 = vrot.slane %v1318, %v1334
    %v1337 = vmul.f32 %v1328, %v1335
    %v1338 = vadd.f32 %v1313, %v1337
    %v1339 = vtanh.pop %v1338
    %v1340 = vsub.f32 1.0, %v1330
    %v1341 = vmul.f32 %v1340, %v1339
    %v1342 = vld [vmem:[%s4 + $0x8] sm:$0x1]
    %v1343 = vld [vmem:[%s4 + $0x9] sm:$0x1]
    %v1344 = vld [vmem:[%s4 + $0xa] sm:$0x1]
    %v1346 = vlaneseq
    %v1347 = vshrl.u32 %v1346, 7
    %v1348 = vsub.s32 0, %v1347
    %v1349 = vrot.slane %v1342, %v1348
    %v1351 = vmul.f32 %v1194, %v1349
    %v1353 = vlaneseq
    %v1354 = vshrl.u32 %v1353, 7
    %v1355 = vsub.s32 0, %v1354
    %v1356 = vrot.slane %v1343, %v1355
    %v1358 = vmul.f32 %v1341, %v1356
    %v1359 = vadd.f32 %v1351, %v1358
    %1360 = vadd.xlane.f32.xlu0 %v1359
    %v1361 = vpop.xlane.xlu0 %1360
    %v1363 = vlaneseq
    %v1364 = vshrl.u32 %v1363, 7
    %v1365 = vsub.s32 0, %v1364
    %v1366 = vrot.slane %v1344, %v1365
    %v1368 = vadd.f32 %v1361, %v1366
    %vm1369 = vcmask 7168
    %1370 = vst.msk [vmem:[%s5] sm:$0xff] %vm1369, %v1368
    // Predicated region
    $region26: #{tpu_custom_call.1} parent=1 // pred_check
      _
    $region27: #{tpu_custom_call.1} parent=1 // pred_check_branch
      %1372 = sbr.rel (0) target = $region29
    $region28: #{tpu_custom_call.1} parent=1 // pred_region
      _
    $region29: #{tpu_custom_call.1} parent=1 // pred_fallthru
      _
    // Predicated region
    $region30: #{tpu_custom_call.1} parent=1 // pred_check
      _
    $region31: #{tpu_custom_call.1} parent=1 // pred_check_branch
      %1374 = sbr.rel (0) target = $region33
    $region32: #{tpu_custom_call.1} parent=1 // pred_region
      _
    $region33: #{tpu_custom_call.1} parent=1 // pred_fallthru
      _
    %1375 = vsyncpa [#allocation4], 1

</llo_original>
